<compile_context>
chip_gen: v7x
topology: tpu7x:2x2x1
jax: 0.10.0
libtpu: 0.0.40
codegen_flags: <defaults>
</compile_context>

<pallas_src>
import functools

import jax
import jax.numpy as jnp
import numpy as np
from jax.experimental import pallas as pl
from jax.experimental.pallas import tpu as pltpu


# ----------------------------- Fused model kernel ----------------------------
def _tweet_lstm_kernel(ids_ref, emb_ref, w_ref, b_ref, out_ref, x_scr,
                       *, hidden, wh_row0, wfc_row0):
    """Fused: in-kernel embedding gather + fwd LSTM scan + 1-step bwd + FC.

    ids_ref : SMEM (B*T,) int32, row-major token ids (scalar prefetch)
    emb_ref : VMEM (V, E)  f32   embedding table
    w_ref   : VMEM slab, bf16:
                rows [0 : E)            -> [Wx_f | Wx_b]   (E, 8H), gate order i,f,o,g
                rows [wh_row0 : +H)     -> Wh_f            (H, 4H)
                rows [wfc_row0 : +2H)   -> Wfc^T           (2H, C)
    b_ref   : VMEM (2, lanes) f32: row 0 = [b_f | b_b] (8H), row 1 = b_fc (C)
    out_ref : VMEM (B, C) f32 logits
    x_scr   : VMEM (T*B, E) f32 scratch for gathered, time-major embeddings
    """
    B, C = out_ref.shape
    TB, E = x_scr.shape
    T = TB // B
    H = hidden
    G4, G8 = 4 * H, 8 * H

    # ---- 1. embedding gather (ids in SMEM, table in VMEM) -------------------
    # 16 tiny dynamic-row reads; time-major so the hoisted matmul below can use
    # static row-block slices per timestep.
    for t in range(T):
        for b in range(B):
            tok = ids_ref[b * T + t]                             # SMEM scalar
            x_scr[pl.ds(t * B + b, 1), :] = emb_ref[pl.ds(tok, 1), :]
    x_bf = x_scr[...].astype(jnp.bfloat16)                       # (T*B, E)

    # ---- 2. hoisted input projection, BOTH directions in one MXU pass -------
    wx = w_ref[0:E, 0:G8]                                        # (E, 8H) bf16
    g_all = (jnp.dot(x_bf, wx, preferred_element_type=jnp.float32)
             + b_ref[0:1, 0:G8])                                 # (T*B, 8H) f32

    # ---- 3. forward recurrence (T unrolled; only h @ Wh on the serial path) --
    wh = w_ref[wh_row0:wh_row0 + H, 0:G4]                        # (H, 4H) bf16
    h = jnp.zeros((B, H), jnp.float32)
    c = jnp.zeros((B, H), jnp.float32)
    for t in range(T):
        gates = g_all[t * B:(t + 1) * B, 0:G4] + jnp.dot(
            h.astype(jnp.bfloat16), wh, preferred_element_type=jnp.float32)
        ifo = jax.nn.sigmoid(gates[:, 0:3 * H])                  # i | f | o
        g = jnp.tanh(gates[:, 3 * H:G4])
        c = ifo[:, H:2 * H] * c + ifo[:, 0:H] * g
        h = ifo[:, 2 * H:3 * H] * jnp.tanh(c)
    h_fwd = h                                                    # (B, H)

    # ---- 4. backward direction: single cell step -----------------------------
    # out[:, -1, :]'s backward half is the FIRST step of the reverse scan with
    # zero initial state (h0 @ Wh_b == 0, f*c0 == 0).
    gb = g_all[(T - 1) * B:T * B, G4:G8]                         # (B, 4H)
    ifo_b = jax.nn.sigmoid(gb[:, 0:3 * H])
    g_b = jnp.tanh(gb[:, 3 * H:G4])
    h_bwd = ifo_b[:, 2 * H:3 * H] * jnp.tanh(ifo_b[:, 0:H] * g_b)

    # ---- 5. fused FC head: split matmul instead of a lane concat -------------
    w_fc_f = w_ref[wfc_row0:wfc_row0 + H, 0:C]                   # (H, C) bf16
    w_fc_b = w_ref[wfc_row0 + H:wfc_row0 + 2 * H, 0:C]
    out_ref[...] = (
        jnp.dot(h_fwd.astype(jnp.bfloat16), w_fc_f,
                preferred_element_type=jnp.float32)
        + jnp.dot(h_bwd.astype(jnp.bfloat16), w_fc_b,
                  preferred_element_type=jnp.float32)
        + b_ref[1:2, 0:C])


# ----------------------------- Wrapper ---------------------------------------
def tweet_lstm_forward(token_ids, kp):
    """token_ids: (B, T) int32; kp: packed kernel params from pack_params()."""
    B, T = token_ids.shape
    emb = kp["embedding"]
    E = emb.shape[1]
    H = kp["hidden"]
    C = kp["num_classes"]
    G4, G8 = 4 * H, 8 * H
    TB = B * T

    ids_flat = token_ids.reshape(-1).astype(jnp.int32)           # (B*T,)

    kernel = functools.partial(
        _tweet_lstm_kernel, hidden=H,
        wh_row0=kp["wh_row0"], wfc_row0=kp["wfc_row0"])

    flops = (2 * TB * E * G8             # hoisted input projection (both dirs)
             + T * 2 * B * H * G4        # recurrent h @ Wh
             + 2 * B * 2 * H * C)        # fc head
    transcendentals = (T + 2) * B * G4
    bytes_accessed = int(ids_flat.size * 4 + emb.size * 4
                         + kp["w_slab"].size * 2 + kp["b_slab"].size * 4
                         + B * C * 4)

    vmem = pl.BlockSpec(memory_space=pltpu.MemorySpace.VMEM)

    return pl.pallas_call(
        kernel,
        out_shape=jax.ShapeDtypeStruct((B, C), jnp.float32),
        grid_spec=pltpu.PrefetchScalarGridSpec(
            num_scalar_prefetch=1,          # token ids -> SMEM
            grid=(1,),                      # single invocation; T stays fused
            in_specs=[vmem, vmem, vmem],    # embedding, weight slab, bias slab
            out_specs=vmem,
            scratch_shapes=[pltpu.VMEM((TB, E), jnp.float32)],
        ),
        compiler_params=pltpu.CompilerParams(
            dimension_semantics=("arbitrary",)),
        cost_estimate=pl.CostEstimate(
            flops=int(flops), transcendentals=int(transcendentals),
            bytes_accessed=bytes_accessed),
    )(ids_flat, emb, kp["w_slab"], kp["b_slab"])


# ----------------------------- Param construction ----------------------------
def make_params(key, vocab, emb_dim, hidden, num_classes):
    """PyTorch-layout f32 parameters (gate order i,f,g,o) for the reference."""
    ks = jax.random.split(key, 11)
    s = 0.1
    H4 = 4 * hidden

    def n(k, shape):
        return (s * jax.random.normal(k, shape)).astype(jnp.float32)

    return {
        "embedding": n(ks[0], (vocab, emb_dim)),     # glove.vectors stand-in
        "w_ih_f": n(ks[1], (H4, emb_dim)),
        "w_hh_f": n(ks[2], (H4, hidden)),
        "b_f": n(ks[3], (H4,)) + n(ks[4], (H4,)),    # b_ih + b_hh
        "w_ih_b": n(ks[5], (H4, emb_dim)),
        "w_hh_b": n(ks[6], (H4, hidden)),
        "b_b": n(ks[7], (H4,)) + n(ks[8], (H4,)),
        "w_fc": n(ks[9], (num_classes, 2 * hidden)),
        "b_fc": n(ks[10], (num_classes,)),
    }


def pack_params(p, hidden, num_classes):
    """Host-side packing: gate reorder (i,f,o,g), dir concat, bf16 slab."""
    H = hidden
    C = num_classes
    E = p["embedding"].shape[1]
    G4, G8 = 4 * H, 8 * H

    # PyTorch gate order (i,f,g,o) -> kernel order (i,f,o,g)
    perm = jnp.asarray(np.concatenate([np.arange(0, 2 * H),      # i, f
                                       np.arange(3 * H, 4 * H),  # o
                                       np.arange(2 * H, 3 * H)]))  # g

    wx_cat = jnp.concatenate([p["w_ih_f"].T[:, perm],
                              p["w_ih_b"].T[:, perm]], axis=1)   # (E, 8H)
    wh_f = p["w_hh_f"].T[:, perm]                                # (H, 4H)
    wfc = p["w_fc"].T                                            # (2H, C)
    b_cat = jnp.concatenate([p["b_f"][perm], p["b_b"][perm]])    # (8H,)

    def _ru(x, m):
        return ((x + m - 1) // m) * m

    lanes = _ru(max(G8, 128), 128)
    wh_row0 = _ru(E, 16)                     # bf16 packs 16 rows / vreg
    wfc_row0 = _ru(wh_row0 + H, 16)
    rows = _ru(wfc_row0 + 2 * H, 16)

    w_slab = jnp.zeros((rows, lanes), jnp.float32)
    w_slab = w_slab.at[0:E, 0:G8].set(wx_cat)
    w_slab = w_slab.at[wh_row0:wh_row0 + H, 0:G4].set(wh_f)
    w_slab = w_slab.at[wfc_row0:wfc_row0 + 2 * H, 0:C].set(wfc)
    w_slab = w_slab.astype(jnp.bfloat16)

    b_slab = jnp.zeros((2, lanes), jnp.float32)
    b_slab = b_slab.at[0, 0:G8].set(b_cat)
    b_slab = b_slab.at[1, 0:C].set(p["b_fc"])

    return {
        "embedding": p["embedding"],
        "w_slab": w_slab,
        "b_slab": b_slab,
        "hidden": H,
        "num_classes": C,
        "wh_row0": wh_row0,
        "wfc_row0": wfc_row0,
    }


# ----------------------------- Pure-JAX reference ----------------------------
def _lstm_ref_dir(x_tbe, w_ih, w_hh, b):
    B = x_tbe.shape[1]
    H = w_hh.shape[1]
    wx, wh = w_ih.T, w_hh.T

    def step(carry, x_t):
        h, c = carry
        gates = x_t @ wx + h @ wh + b
        i = jax.nn.sigmoid(gates[:, 0 * H:1 * H])
        f = jax.nn.sigmoid(gates[:, 1 * H:2 * H])
        g = jnp.tanh(gates[:, 2 * H:3 * H])
        o = jax.nn.sigmoid(gates[:, 3 * H:4 * H])
        c = f * c + i * g
        h = o * jnp.tanh(c)
        return (h, c), h

    init = (jnp.zeros((B, H), jnp.float32), jnp.zeros((B, H), jnp.float32))
    _, hs = jax.lax.scan(step, init, x_tbe)
    return hs


def tweet_lstm_ref(token_ids, p):
    """Full bidirectional scan (validates gather, reorder and 1-step bwd)."""
    emb = p["embedding"][token_ids]                 # (B, T, E)
    x = jnp.transpose(emb, (1, 0, 2))               # (T, B, E)
    h_f = _lstm_ref_dir(x, p["w_ih_f"], p["w_hh_f"], p["b_f"])
    h_b = _lstm_ref_dir(x[::-1], p["w_ih_b"], p["w_hh_b"], p["b_b"])
    last = jnp.concatenate([h_f[-1], h_b[0]], axis=-1)   # = out[:, -1, :]
    return last @ p["w_fc"].T + p["b_fc"]


# ----------------------------- Main -------------------------------------------
if __name__ == "__main__":
    VOCAB = 50
    EMB_DIM = 32      # input_size
    HIDDEN = 32       # hidden_size
    NUM_CLASSES = 4
    BATCH = 2
    SEQ = 8

    key = jax.random.PRNGKey(0)
    k_par, k_tok = jax.random.split(key)
    params = make_params(k_par, VOCAB, EMB_DIM, HIDDEN, NUM_CLASSES)
    kparams = pack_params(params, HIDDEN, NUM_CLASSES)

    # x: integer token ids, shape (B, T) — matches nn.Embedding input
    token_ids = jax.random.randint(k_tok, (BATCH, SEQ), 0, VOCAB, jnp.int32)

    out = jax.block_until_ready(tweet_lstm_forward(token_ids, kparams))
    ref = jax.block_until_ready(tweet_lstm_ref(token_ids, params))

    # Tolerance accounts for bf16 MXU-operand quantization (f32 accumulation);
    # a real bug (gate order / slicing / gather) produces errors >> 1e-2.
    np.testing.assert_allclose(np.asarray(out), np.asarray(ref),
                               rtol=1e-2, atol=1e-2)
    print("KERNEL_OK")
</pallas_src>

<mosaic_0001>
module attributes {stable_mosaic.version = 11 : i64} {
  func.func @_tweet_lstm_kernel(%arg0: i32, %arg1: memref<16xi32, #tpu.memory_space<smem>>, %arg2: memref<50x32xf32, #tpu.memory_space<vmem>>, %arg3: memref<128x256xbf16, #tpu.memory_space<vmem>>, %arg4: memref<2x256xf32, #tpu.memory_space<vmem>>, %arg5: memref<2x4xf32, #tpu.memory_space<vmem>>, %arg6: memref<16x32xf32, #tpu.memory_space<vmem>>) attributes {dimension_semantics = [#tpu.dimension_semantics<arbitrary>], iteration_bounds = array<i64: 1>, scalar_prefetch = 1 : i64, scratch_operands = 1 : i64, tpu.core_type = #tpu.core_type<tc>, window_params = [{pipeline_mode = #tpu.pipeline_mode<synchronous>, transform_indices = @transform_0, window_bounds = array<i64: 50, 32>}, {pipeline_mode = #tpu.pipeline_mode<synchronous>, transform_indices = @transform_1, window_bounds = array<i64: 128, 256>}, {pipeline_mode = #tpu.pipeline_mode<synchronous>, transform_indices = @transform_2, window_bounds = array<i64: 2, 256>}, {pipeline_mode = #tpu.pipeline_mode<synchronous>, transform_indices = @transform_3, window_bounds = array<i64: 2, 4>}]} {
    %c0 = arith.constant 0 : index
    %0 = memref.load %arg1[%c0] : memref<16xi32, #tpu.memory_space<smem>>
    %1 = arith.index_cast %0 : i32 to index
    %c0_0 = arith.constant 0 : index
    %2 = vector.load %arg2[%1, %c0_0] : memref<50x32xf32, #tpu.memory_space<vmem>>, vector<1x32xf32>
    %c0_1 = arith.constant 0 : index
    %c0_2 = arith.constant 0 : index
    %3 = vector.load %arg6[%c0_1, %c0_2] : memref<16x32xf32, #tpu.memory_space<vmem>>, vector<1x32xf32>
    tpu.vector_store %arg6[%c0_1, %c0_2], %2 {strides = array<i32>} : memref<16x32xf32, #tpu.memory_space<vmem>>, vector<1x32xf32>,
    %c8 = arith.constant 8 : index
    %4 = memref.load %arg1[%c8] : memref<16xi32, #tpu.memory_space<smem>>
    %5 = arith.index_cast %4 : i32 to index
    %c0_3 = arith.constant 0 : index
    %6 = vector.load %arg2[%5, %c0_3] : memref<50x32xf32, #tpu.memory_space<vmem>>, vector<1x32xf32>
    %c1 = arith.constant 1 : index
    %c0_4 = arith.constant 0 : index
    %7 = vector.load %arg6[%c1, %c0_4] : memref<16x32xf32, #tpu.memory_space<vmem>>, vector<1x32xf32>
    tpu.vector_store %arg6[%c1, %c0_4], %6 {strides = array<i32>} : memref<16x32xf32, #tpu.memory_space<vmem>>, vector<1x32xf32>,
    %c1_5 = arith.constant 1 : index
    %8 = memref.load %arg1[%c1_5] : memref<16xi32, #tpu.memory_space<smem>>
    %9 = arith.index_cast %8 : i32 to index
    %c0_6 = arith.constant 0 : index
    %10 = vector.load %arg2[%9, %c0_6] : memref<50x32xf32, #tpu.memory_space<vmem>>, vector<1x32xf32>
    %c2 = arith.constant 2 : index
    %c0_7 = arith.constant 0 : index
    %11 = vector.load %arg6[%c2, %c0_7] : memref<16x32xf32, #tpu.memory_space<vmem>>, vector<1x32xf32>
    tpu.vector_store %arg6[%c2, %c0_7], %10 {strides = array<i32>} : memref<16x32xf32, #tpu.memory_space<vmem>>, vector<1x32xf32>,
    %c9 = arith.constant 9 : index
    %12 = memref.load %arg1[%c9] : memref<16xi32, #tpu.memory_space<smem>>
    %13 = arith.index_cast %12 : i32 to index
    %c0_8 = arith.constant 0 : index
    %14 = vector.load %arg2[%13, %c0_8] : memref<50x32xf32, #tpu.memory_space<vmem>>, vector<1x32xf32>
    %c3 = arith.constant 3 : index
    %c0_9 = arith.constant 0 : index
    %15 = vector.load %arg6[%c3, %c0_9] : memref<16x32xf32, #tpu.memory_space<vmem>>, vector<1x32xf32>
    tpu.vector_store %arg6[%c3, %c0_9], %14 {strides = array<i32>} : memref<16x32xf32, #tpu.memory_space<vmem>>, vector<1x32xf32>,
    %c2_10 = arith.constant 2 : index
    %16 = memref.load %arg1[%c2_10] : memref<16xi32, #tpu.memory_space<smem>>
    %17 = arith.index_cast %16 : i32 to index
    %c0_11 = arith.constant 0 : index
    %18 = vector.load %arg2[%17, %c0_11] : memref<50x32xf32, #tpu.memory_space<vmem>>, vector<1x32xf32>
    %c4 = arith.constant 4 : index
    %c0_12 = arith.constant 0 : index
    %19 = vector.load %arg6[%c4, %c0_12] : memref<16x32xf32, #tpu.memory_space<vmem>>, vector<1x32xf32>
    tpu.vector_store %arg6[%c4, %c0_12], %18 {strides = array<i32>} : memref<16x32xf32, #tpu.memory_space<vmem>>, vector<1x32xf32>,
    %c10 = arith.constant 10 : index
    %20 = memref.load %arg1[%c10] : memref<16xi32, #tpu.memory_space<smem>>
    %21 = arith.index_cast %20 : i32 to index
    %c0_13 = arith.constant 0 : index
    %22 = vector.load %arg2[%21, %c0_13] : memref<50x32xf32, #tpu.memory_space<vmem>>, vector<1x32xf32>
    %c5 = arith.constant 5 : index
    %c0_14 = arith.constant 0 : index
    %23 = vector.load %arg6[%c5, %c0_14] : memref<16x32xf32, #tpu.memory_space<vmem>>, vector<1x32xf32>
    tpu.vector_store %arg6[%c5, %c0_14], %22 {strides = array<i32>} : memref<16x32xf32, #tpu.memory_space<vmem>>, vector<1x32xf32>,
    %c3_15 = arith.constant 3 : index
    %24 = memref.load %arg1[%c3_15] : memref<16xi32, #tpu.memory_space<smem>>
    %25 = arith.index_cast %24 : i32 to index
    %c0_16 = arith.constant 0 : index
    %26 = vector.load %arg2[%25, %c0_16] : memref<50x32xf32, #tpu.memory_space<vmem>>, vector<1x32xf32>
    %c6 = arith.constant 6 : index
    %c0_17 = arith.constant 0 : index
    %27 = vector.load %arg6[%c6, %c0_17] : memref<16x32xf32, #tpu.memory_space<vmem>>, vector<1x32xf32>
    tpu.vector_store %arg6[%c6, %c0_17], %26 {strides = array<i32>} : memref<16x32xf32, #tpu.memory_space<vmem>>, vector<1x32xf32>,
    %c11 = arith.constant 11 : index
    %28 = memref.load %arg1[%c11] : memref<16xi32, #tpu.memory_space<smem>>
    %29 = arith.index_cast %28 : i32 to index
    %c0_18 = arith.constant 0 : index
    %30 = vector.load %arg2[%29, %c0_18] : memref<50x32xf32, #tpu.memory_space<vmem>>, vector<1x32xf32>
    %c7 = arith.constant 7 : index
    %c0_19 = arith.constant 0 : index
    %31 = vector.load %arg6[%c7, %c0_19] : memref<16x32xf32, #tpu.memory_space<vmem>>, vector<1x32xf32>
    tpu.vector_store %arg6[%c7, %c0_19], %30 {strides = array<i32>} : memref<16x32xf32, #tpu.memory_space<vmem>>, vector<1x32xf32>,
    %c4_20 = arith.constant 4 : index
    %32 = memref.load %arg1[%c4_20] : memref<16xi32, #tpu.memory_space<smem>>
    %33 = arith.index_cast %32 : i32 to index
    %c0_21 = arith.constant 0 : index
    %34 = vector.load %arg2[%33, %c0_21] : memref<50x32xf32, #tpu.memory_space<vmem>>, vector<1x32xf32>
    %c8_22 = arith.constant 8 : index
    %c0_23 = arith.constant 0 : index
    %35 = vector.load %arg6[%c8_22, %c0_23] : memref<16x32xf32, #tpu.memory_space<vmem>>, vector<1x32xf32>
    tpu.vector_store %arg6[%c8_22, %c0_23], %34 {strides = array<i32>} : memref<16x32xf32, #tpu.memory_space<vmem>>, vector<1x32xf32>,
    %c12 = arith.constant 12 : index
    %36 = memref.load %arg1[%c12] : memref<16xi32, #tpu.memory_space<smem>>
    %37 = arith.index_cast %36 : i32 to index
    %c0_24 = arith.constant 0 : index
    %38 = vector.load %arg2[%37, %c0_24] : memref<50x32xf32, #tpu.memory_space<vmem>>, vector<1x32xf32>
    %c9_25 = arith.constant 9 : index
    %c0_26 = arith.constant 0 : index
    %39 = vector.load %arg6[%c9_25, %c0_26] : memref<16x32xf32, #tpu.memory_space<vmem>>, vector<1x32xf32>
    tpu.vector_store %arg6[%c9_25, %c0_26], %38 {strides = array<i32>} : memref<16x32xf32, #tpu.memory_space<vmem>>, vector<1x32xf32>,
    %c5_27 = arith.constant 5 : index
    %40 = memref.load %arg1[%c5_27] : memref<16xi32, #tpu.memory_space<smem>>
    %41 = arith.index_cast %40 : i32 to index
    %c0_28 = arith.constant 0 : index
    %42 = vector.load %arg2[%41, %c0_28] : memref<50x32xf32, #tpu.memory_space<vmem>>, vector<1x32xf32>
    %c10_29 = arith.constant 10 : index
    %c0_30 = arith.constant 0 : index
    %43 = vector.load %arg6[%c10_29, %c0_30] : memref<16x32xf32, #tpu.memory_space<vmem>>, vector<1x32xf32>
    tpu.vector_store %arg6[%c10_29, %c0_30], %42 {strides = array<i32>} : memref<16x32xf32, #tpu.memory_space<vmem>>, vector<1x32xf32>,
    %c13 = arith.constant 13 : index
    %44 = memref.load %arg1[%c13] : memref<16xi32, #tpu.memory_space<smem>>
    %45 = arith.index_cast %44 : i32 to index
    %c0_31 = arith.constant 0 : index
    %46 = vector.load %arg2[%45, %c0_31] : memref<50x32xf32, #tpu.memory_space<vmem>>, vector<1x32xf32>
    %c11_32 = arith.constant 11 : index
    %c0_33 = arith.constant 0 : index
    %47 = vector.load %arg6[%c11_32, %c0_33] : memref<16x32xf32, #tpu.memory_space<vmem>>, vector<1x32xf32>
    tpu.vector_store %arg6[%c11_32, %c0_33], %46 {strides = array<i32>} : memref<16x32xf32, #tpu.memory_space<vmem>>, vector<1x32xf32>,
    %c6_34 = arith.constant 6 : index
    %48 = memref.load %arg1[%c6_34] : memref<16xi32, #tpu.memory_space<smem>>
    %49 = arith.index_cast %48 : i32 to index
    %c0_35 = arith.constant 0 : index
    %50 = vector.load %arg2[%49, %c0_35] : memref<50x32xf32, #tpu.memory_space<vmem>>, vector<1x32xf32>
    %c12_36 = arith.constant 12 : index
    %c0_37 = arith.constant 0 : index
    %51 = vector.load %arg6[%c12_36, %c0_37] : memref<16x32xf32, #tpu.memory_space<vmem>>, vector<1x32xf32>
    tpu.vector_store %arg6[%c12_36, %c0_37], %50 {strides = array<i32>} : memref<16x32xf32, #tpu.memory_space<vmem>>, vector<1x32xf32>,
    %c14 = arith.constant 14 : index
    %52 = memref.load %arg1[%c14] : memref<16xi32, #tpu.memory_space<smem>>
    %53 = arith.index_cast %52 : i32 to index
    %c0_38 = arith.constant 0 : index
    %54 = vector.load %arg2[%53, %c0_38] : memref<50x32xf32, #tpu.memory_space<vmem>>, vector<1x32xf32>
    %c13_39 = arith.constant 13 : index
    %c0_40 = arith.constant 0 : index
    %55 = vector.load %arg6[%c13_39, %c0_40] : memref<16x32xf32, #tpu.memory_space<vmem>>, vector<1x32xf32>
    tpu.vector_store %arg6[%c13_39, %c0_40], %54 {strides = array<i32>} : memref<16x32xf32, #tpu.memory_space<vmem>>, vector<1x32xf32>,
    %c7_41 = arith.constant 7 : index
    %56 = memref.load %arg1[%c7_41] : memref<16xi32, #tpu.memory_space<smem>>
    %57 = arith.index_cast %56 : i32 to index
    %c0_42 = arith.constant 0 : index
    %58 = vector.load %arg2[%57, %c0_42] : memref<50x32xf32, #tpu.memory_space<vmem>>, vector<1x32xf32>
    %c14_43 = arith.constant 14 : index
    %c0_44 = arith.constant 0 : index
    %59 = vector.load %arg6[%c14_43, %c0_44] : memref<16x32xf32, #tpu.memory_space<vmem>>, vector<1x32xf32>
    tpu.vector_store %arg6[%c14_43, %c0_44], %58 {strides = array<i32>} : memref<16x32xf32, #tpu.memory_space<vmem>>, vector<1x32xf32>,
    %c15 = arith.constant 15 : index
    %60 = memref.load %arg1[%c15] : memref<16xi32, #tpu.memory_space<smem>>
    %61 = arith.index_cast %60 : i32 to index
    %c0_45 = arith.constant 0 : index
    %62 = vector.load %arg2[%61, %c0_45] : memref<50x32xf32, #tpu.memory_space<vmem>>, vector<1x32xf32>
    %c15_46 = arith.constant 15 : index
    %c0_47 = arith.constant 0 : index
    %63 = vector.load %arg6[%c15_46, %c0_47] : memref<16x32xf32, #tpu.memory_space<vmem>>, vector<1x32xf32>
    tpu.vector_store %arg6[%c15_46, %c0_47], %62 {strides = array<i32>} : memref<16x32xf32, #tpu.memory_space<vmem>>, vector<1x32xf32>,
    %c0_48 = arith.constant 0 : index
    %c0_49 = arith.constant 0 : index
    %64 = vector.load %arg6[%c0_48, %c0_49] : memref<16x32xf32, #tpu.memory_space<vmem>>, vector<16x32xf32>
    %65 = arith.truncf %64 : vector<16x32xf32> to vector<16x32xbf16>
    %c0_50 = arith.constant 0 : index
    %c0_51 = arith.constant 0 : index
    %66 = vector.load %arg3[%c0_50, %c0_51] : memref<128x256xbf16, #tpu.memory_space<vmem>>, vector<32x256xbf16>
    %cst = arith.constant dense<0.000000e+00> : vector<16x256xf32>
    %67 = tpu.matmul %65, %66, %cst {dimension_numbers = #tpu.dot_dimension_numbers<[1], [0], [0], [1], [0, 0, 1, 1], [], []>} : vector<16x32xbf16>, vector<32x256xbf16>, vector<16x256xf32> -> vector<16x256xf32>
    %c0_52 = arith.constant 0 : index
    %c0_53 = arith.constant 0 : index
    %68 = vector.load %arg4[%c0_52, %c0_53] : memref<2x256xf32, #tpu.memory_space<vmem>>, vector<1x256xf32>
    %69 = vector.broadcast %68 : vector<1x256xf32> to vector<16x256xf32>
    %70 = arith.addf %67, %69 : vector<16x256xf32>
    %c32 = arith.constant 32 : index
    %c0_54 = arith.constant 0 : index
    %71 = vector.load %arg3[%c32, %c0_54] : memref<128x256xbf16, #tpu.memory_space<vmem>>, vector<32x128xbf16>
    %cst_55 = arith.constant 0.000000e+00 : f32
    %72 = vector.broadcast %cst_55 : f32 to vector<2x32xf32>
    %cst_56 = arith.constant 0.000000e+00 : f32
    %73 = vector.broadcast %cst_56 : f32 to vector<2x32xf32>
    %74 = vector.extract_strided_slice %70 {offsets = [0, 0], sizes = [2, 128], strides = [1, 1]} : vector<16x256xf32> to vector<2x128xf32>
    %75 = arith.truncf %72 : vector<2x32xf32> to vector<2x32xbf16>
    %cst_57 = arith.constant dense<0.000000e+00> : vector<2x128xf32>
    %76 = tpu.matmul %75, %71, %cst_57 {dimension_numbers = #tpu.dot_dimension_numbers<[1], [0], [0], [1], [0, 0, 1, 1], [], []>} : vector<2x32xbf16>, vector<32x128xbf16>, vector<2x128xf32> -> vector<2x128xf32>
    %77 = arith.addf %74, %76 : vector<2x128xf32>
    %78 = vector.extract_strided_slice %77 {offsets = [0, 0], sizes = [2, 96], strides = [1, 1]} : vector<2x128xf32> to vector<2x96xf32>
    %79 = arith.negf %78 : vector<2x96xf32>
    %80 = math.exp %79 : vector<2x96xf32>
    %cst_58 = arith.constant 1.000000e+00 : f32
    %81 = vector.broadcast %cst_58 : f32 to vector<2x96xf32>
    %82 = arith.addf %81, %80 : vector<2x96xf32>
    %83 = arith.divf %81, %82 : vector<2x96xf32>
    %84 = vector.extract_strided_slice %77 {offsets = [0, 96], sizes = [2, 32], strides = [1, 1]} : vector<2x128xf32> to vector<2x32xf32>
    %85 = math.tanh %84 : vector<2x32xf32>
    %86 = vector.extract_strided_slice %83 {offsets = [0, 32], sizes = [2, 32], strides = [1, 1]} : vector<2x96xf32> to vector<2x32xf32>
    %87 = arith.mulf %86, %73 : vector<2x32xf32>
    %88 = vector.extract_strided_slice %83 {offsets = [0, 0], sizes = [2, 32], strides = [1, 1]} : vector<2x96xf32> to vector<2x32xf32>
    %89 = arith.mulf %88, %85 : vector<2x32xf32>
    %90 = arith.addf %87, %89 : vector<2x32xf32>
    %91 = vector.extract_strided_slice %83 {offsets = [0, 64], sizes = [2, 32], strides = [1, 1]} : vector<2x96xf32> to vector<2x32xf32>
    %92 = math.tanh %90 : vector<2x32xf32>
    %93 = arith.mulf %91, %92 : vector<2x32xf32>
    %94 = vector.extract_strided_slice %70 {offsets = [2, 0], sizes = [2, 128], strides = [1, 1]} : vector<16x256xf32> to vector<2x128xf32>
    %95 = arith.truncf %93 : vector<2x32xf32> to vector<2x32xbf16>
    %cst_59 = arith.constant dense<0.000000e+00> : vector<2x128xf32>
    %96 = tpu.matmul %95, %71, %cst_59 {dimension_numbers = #tpu.dot_dimension_numbers<[1], [0], [0], [1], [0, 0, 1, 1], [], []>} : vector<2x32xbf16>, vector<32x128xbf16>, vector<2x128xf32> -> vector<2x128xf32>
    %97 = arith.addf %94, %96 : vector<2x128xf32>
    %98 = vector.extract_strided_slice %97 {offsets = [0, 0], sizes = [2, 96], strides = [1, 1]} : vector<2x128xf32> to vector<2x96xf32>
    %99 = arith.negf %98 : vector<2x96xf32>
    %100 = math.exp %99 : vector<2x96xf32>
    %cst_60 = arith.constant 1.000000e+00 : f32
    %101 = vector.broadcast %cst_60 : f32 to vector<2x96xf32>
    %102 = arith.addf %101, %100 : vector<2x96xf32>
    %103 = arith.divf %101, %102 : vector<2x96xf32>
    %104 = vector.extract_strided_slice %97 {offsets = [0, 96], sizes = [2, 32], strides = [1, 1]} : vector<2x128xf32> to vector<2x32xf32>
    %105 = math.tanh %104 : vector<2x32xf32>
    %106 = vector.extract_strided_slice %103 {offsets = [0, 32], sizes = [2, 32], strides = [1, 1]} : vector<2x96xf32> to vector<2x32xf32>
    %107 = arith.mulf %106, %90 : vector<2x32xf32>
    %108 = vector.extract_strided_slice %103 {offsets = [0, 0], sizes = [2, 32], strides = [1, 1]} : vector<2x96xf32> to vector<2x32xf32>
    %109 = arith.mulf %108, %105 : vector<2x32xf32>
    %110 = arith.addf %107, %109 : vector<2x32xf32>
    %111 = vector.extract_strided_slice %103 {offsets = [0, 64], sizes = [2, 32], strides = [1, 1]} : vector<2x96xf32> to vector<2x32xf32>
    %112 = math.tanh %110 : vector<2x32xf32>
    %113 = arith.mulf %111, %112 : vector<2x32xf32>
    %114 = vector.extract_strided_slice %70 {offsets = [4, 0], sizes = [2, 128], strides = [1, 1]} : vector<16x256xf32> to vector<2x128xf32>
    %115 = arith.truncf %113 : vector<2x32xf32> to vector<2x32xbf16>
    %cst_61 = arith.constant dense<0.000000e+00> : vector<2x128xf32>
    %116 = tpu.matmul %115, %71, %cst_61 {dimension_numbers = #tpu.dot_dimension_numbers<[1], [0], [0], [1], [0, 0, 1, 1], [], []>} : vector<2x32xbf16>, vector<32x128xbf16>, vector<2x128xf32> -> vector<2x128xf32>
    %117 = arith.addf %114, %116 : vector<2x128xf32>
    %118 = vector.extract_strided_slice %117 {offsets = [0, 0], sizes = [2, 96], strides = [1, 1]} : vector<2x128xf32> to vector<2x96xf32>
    %119 = arith.negf %118 : vector<2x96xf32>
    %120 = math.exp %119 : vector<2x96xf32>
    %cst_62 = arith.constant 1.000000e+00 : f32
    %121 = vector.broadcast %cst_62 : f32 to vector<2x96xf32>
    %122 = arith.addf %121, %120 : vector<2x96xf32>
    %123 = arith.divf %121, %122 : vector<2x96xf32>
    %124 = vector.extract_strided_slice %117 {offsets = [0, 96], sizes = [2, 32], strides = [1, 1]} : vector<2x128xf32> to vector<2x32xf32>
    %125 = math.tanh %124 : vector<2x32xf32>
    %126 = vector.extract_strided_slice %123 {offsets = [0, 32], sizes = [2, 32], strides = [1, 1]} : vector<2x96xf32> to vector<2x32xf32>
    %127 = arith.mulf %126, %110 : vector<2x32xf32>
    %128 = vector.extract_strided_slice %123 {offsets = [0, 0], sizes = [2, 32], strides = [1, 1]} : vector<2x96xf32> to vector<2x32xf32>
    %129 = arith.mulf %128, %125 : vector<2x32xf32>
    %130 = arith.addf %127, %129 : vector<2x32xf32>
    %131 = vector.extract_strided_slice %123 {offsets = [0, 64], sizes = [2, 32], strides = [1, 1]} : vector<2x96xf32> to vector<2x32xf32>
    %132 = math.tanh %130 : vector<2x32xf32>
    %133 = arith.mulf %131, %132 : vector<2x32xf32>
    %134 = vector.extract_strided_slice %70 {offsets = [6, 0], sizes = [2, 128], strides = [1, 1]} : vector<16x256xf32> to vector<2x128xf32>
    %135 = arith.truncf %133 : vector<2x32xf32> to vector<2x32xbf16>
    %cst_63 = arith.constant dense<0.000000e+00> : vector<2x128xf32>
    %136 = tpu.matmul %135, %71, %cst_63 {dimension_numbers = #tpu.dot_dimension_numbers<[1], [0], [0], [1], [0, 0, 1, 1], [], []>} : vector<2x32xbf16>, vector<32x128xbf16>, vector<2x128xf32> -> vector<2x128xf32>
    %137 = arith.addf %134, %136 : vector<2x128xf32>
    %138 = vector.extract_strided_slice %137 {offsets = [0, 0], sizes = [2, 96], strides = [1, 1]} : vector<2x128xf32> to vector<2x96xf32>
    %139 = arith.negf %138 : vector<2x96xf32>
    %140 = math.exp %139 : vector<2x96xf32>
    %cst_64 = arith.constant 1.000000e+00 : f32
    %141 = vector.broadcast %cst_64 : f32 to vector<2x96xf32>
    %142 = arith.addf %141, %140 : vector<2x96xf32>
    %143 = arith.divf %141, %142 : vector<2x96xf32>
    %144 = vector.extract_strided_slice %137 {offsets = [0, 96], sizes = [2, 32], strides = [1, 1]} : vector<2x128xf32> to vector<2x32xf32>
    %145 = math.tanh %144 : vector<2x32xf32>
    %146 = vector.extract_strided_slice %143 {offsets = [0, 32], sizes = [2, 32], strides = [1, 1]} : vector<2x96xf32> to vector<2x32xf32>
    %147 = arith.mulf %146, %130 : vector<2x32xf32>
    %148 = vector.extract_strided_slice %143 {offsets = [0, 0], sizes = [2, 32], strides = [1, 1]} : vector<2x96xf32> to vector<2x32xf32>
    %149 = arith.mulf %148, %145 : vector<2x32xf32>
    %150 = arith.addf %147, %149 : vector<2x32xf32>
    %151 = vector.extract_strided_slice %143 {offsets = [0, 64], sizes = [2, 32], strides = [1, 1]} : vector<2x96xf32> to vector<2x32xf32>
    %152 = math.tanh %150 : vector<2x32xf32>
    %153 = arith.mulf %151, %152 : vector<2x32xf32>
    %154 = vector.extract_strided_slice %70 {offsets = [8, 0], sizes = [2, 128], strides = [1, 1]} : vector<16x256xf32> to vector<2x128xf32>
    %155 = arith.truncf %153 : vector<2x32xf32> to vector<2x32xbf16>
    %cst_65 = arith.constant dense<0.000000e+00> : vector<2x128xf32>
    %156 = tpu.matmul %155, %71, %cst_65 {dimension_numbers = #tpu.dot_dimension_numbers<[1], [0], [0], [1], [0, 0, 1, 1], [], []>} : vector<2x32xbf16>, vector<32x128xbf16>, vector<2x128xf32> -> vector<2x128xf32>
    %157 = arith.addf %154, %156 : vector<2x128xf32>
    %158 = vector.extract_strided_slice %157 {offsets = [0, 0], sizes = [2, 96], strides = [1, 1]} : vector<2x128xf32> to vector<2x96xf32>
    %159 = arith.negf %158 : vector<2x96xf32>
    %160 = math.exp %159 : vector<2x96xf32>
    %cst_66 = arith.constant 1.000000e+00 : f32
    %161 = vector.broadcast %cst_66 : f32 to vector<2x96xf32>
    %162 = arith.addf %161, %160 : vector<2x96xf32>
    %163 = arith.divf %161, %162 : vector<2x96xf32>
    %164 = vector.extract_strided_slice %157 {offsets = [0, 96], sizes = [2, 32], strides = [1, 1]} : vector<2x128xf32> to vector<2x32xf32>
    %165 = math.tanh %164 : vector<2x32xf32>
    %166 = vector.extract_strided_slice %163 {offsets = [0, 32], sizes = [2, 32], strides = [1, 1]} : vector<2x96xf32> to vector<2x32xf32>
    %167 = arith.mulf %166, %150 : vector<2x32xf32>
    %168 = vector.extract_strided_slice %163 {offsets = [0, 0], sizes = [2, 32], strides = [1, 1]} : vector<2x96xf32> to vector<2x32xf32>
    %169 = arith.mulf %168, %165 : vector<2x32xf32>
    %170 = arith.addf %167, %169 : vector<2x32xf32>
    %171 = vector.extract_strided_slice %163 {offsets = [0, 64], sizes = [2, 32], strides = [1, 1]} : vector<2x96xf32> to vector<2x32xf32>
    %172 = math.tanh %170 : vector<2x32xf32>
    %173 = arith.mulf %171, %172 : vector<2x32xf32>
    %174 = vector.extract_strided_slice %70 {offsets = [10, 0], sizes = [2, 128], strides = [1, 1]} : vector<16x256xf32> to vector<2x128xf32>
    %175 = arith.truncf %173 : vector<2x32xf32> to vector<2x32xbf16>
    %cst_67 = arith.constant dense<0.000000e+00> : vector<2x128xf32>
    %176 = tpu.matmul %175, %71, %cst_67 {dimension_numbers = #tpu.dot_dimension_numbers<[1], [0], [0], [1], [0, 0, 1, 1], [], []>} : vector<2x32xbf16>, vector<32x128xbf16>, vector<2x128xf32> -> vector<2x128xf32>
    %177 = arith.addf %174, %176 : vector<2x128xf32>
    %178 = vector.extract_strided_slice %177 {offsets = [0, 0], sizes = [2, 96], strides = [1, 1]} : vector<2x128xf32> to vector<2x96xf32>
    %179 = arith.negf %178 : vector<2x96xf32>
    %180 = math.exp %179 : vector<2x96xf32>
    %cst_68 = arith.constant 1.000000e+00 : f32
    %181 = vector.broadcast %cst_68 : f32 to vector<2x96xf32>
    %182 = arith.addf %181, %180 : vector<2x96xf32>
    %183 = arith.divf %181, %182 : vector<2x96xf32>
    %184 = vector.extract_strided_slice %177 {offsets = [0, 96], sizes = [2, 32], strides = [1, 1]} : vector<2x128xf32> to vector<2x32xf32>
    %185 = math.tanh %184 : vector<2x32xf32>
    %186 = vector.extract_strided_slice %183 {offsets = [0, 32], sizes = [2, 32], strides = [1, 1]} : vector<2x96xf32> to vector<2x32xf32>
    %187 = arith.mulf %186, %170 : vector<2x32xf32>
    %188 = vector.extract_strided_slice %183 {offsets = [0, 0], sizes = [2, 32], strides = [1, 1]} : vector<2x96xf32> to vector<2x32xf32>
    %189 = arith.mulf %188, %185 : vector<2x32xf32>
    %190 = arith.addf %187, %189 : vector<2x32xf32>
    %191 = vector.extract_strided_slice %183 {offsets = [0, 64], sizes = [2, 32], strides = [1, 1]} : vector<2x96xf32> to vector<2x32xf32>
    %192 = math.tanh %190 : vector<2x32xf32>
    %193 = arith.mulf %191, %192 : vector<2x32xf32>
    %194 = vector.extract_strided_slice %70 {offsets = [12, 0], sizes = [2, 128], strides = [1, 1]} : vector<16x256xf32> to vector<2x128xf32>
    %195 = arith.truncf %193 : vector<2x32xf32> to vector<2x32xbf16>
    %cst_69 = arith.constant dense<0.000000e+00> : vector<2x128xf32>
    %196 = tpu.matmul %195, %71, %cst_69 {dimension_numbers = #tpu.dot_dimension_numbers<[1], [0], [0], [1], [0, 0, 1, 1], [], []>} : vector<2x32xbf16>, vector<32x128xbf16>, vector<2x128xf32> -> vector<2x128xf32>
    %197 = arith.addf %194, %196 : vector<2x128xf32>
    %198 = vector.extract_strided_slice %197 {offsets = [0, 0], sizes = [2, 96], strides = [1, 1]} : vector<2x128xf32> to vector<2x96xf32>
    %199 = arith.negf %198 : vector<2x96xf32>
    %200 = math.exp %199 : vector<2x96xf32>
    %cst_70 = arith.constant 1.000000e+00 : f32
    %201 = vector.broadcast %cst_70 : f32 to vector<2x96xf32>
    %202 = arith.addf %201, %200 : vector<2x96xf32>
    %203 = arith.divf %201, %202 : vector<2x96xf32>
    %204 = vector.extract_strided_slice %197 {offsets = [0, 96], sizes = [2, 32], strides = [1, 1]} : vector<2x128xf32> to vector<2x32xf32>
    %205 = math.tanh %204 : vector<2x32xf32>
    %206 = vector.extract_strided_slice %203 {offsets = [0, 32], sizes = [2, 32], strides = [1, 1]} : vector<2x96xf32> to vector<2x32xf32>
    %207 = arith.mulf %206, %190 : vector<2x32xf32>
    %208 = vector.extract_strided_slice %203 {offsets = [0, 0], sizes = [2, 32], strides = [1, 1]} : vector<2x96xf32> to vector<2x32xf32>
    %209 = arith.mulf %208, %205 : vector<2x32xf32>
    %210 = arith.addf %207, %209 : vector<2x32xf32>
    %211 = vector.extract_strided_slice %203 {offsets = [0, 64], sizes = [2, 32], strides = [1, 1]} : vector<2x96xf32> to vector<2x32xf32>
    %212 = math.tanh %210 : vector<2x32xf32>
    %213 = arith.mulf %211, %212 : vector<2x32xf32>
    %214 = vector.extract_strided_slice %70 {offsets = [14, 0], sizes = [2, 128], strides = [1, 1]} : vector<16x256xf32> to vector<2x128xf32>
    %215 = arith.truncf %213 : vector<2x32xf32> to vector<2x32xbf16>
    %cst_71 = arith.constant dense<0.000000e+00> : vector<2x128xf32>
    %216 = tpu.matmul %215, %71, %cst_71 {dimension_numbers = #tpu.dot_dimension_numbers<[1], [0], [0], [1], [0, 0, 1, 1], [], []>} : vector<2x32xbf16>, vector<32x128xbf16>, vector<2x128xf32> -> vector<2x128xf32>
    %217 = arith.addf %214, %216 : vector<2x128xf32>
    %218 = vector.extract_strided_slice %217 {offsets = [0, 0], sizes = [2, 96], strides = [1, 1]} : vector<2x128xf32> to vector<2x96xf32>
    %219 = arith.negf %218 : vector<2x96xf32>
    %220 = math.exp %219 : vector<2x96xf32>
    %cst_72 = arith.constant 1.000000e+00 : f32
    %221 = vector.broadcast %cst_72 : f32 to vector<2x96xf32>
    %222 = arith.addf %221, %220 : vector<2x96xf32>
    %223 = arith.divf %221, %222 : vector<2x96xf32>
    %224 = vector.extract_strided_slice %217 {offsets = [0, 96], sizes = [2, 32], strides = [1, 1]} : vector<2x128xf32> to vector<2x32xf32>
    %225 = math.tanh %224 : vector<2x32xf32>
    %226 = vector.extract_strided_slice %223 {offsets = [0, 32], sizes = [2, 32], strides = [1, 1]} : vector<2x96xf32> to vector<2x32xf32>
    %227 = arith.mulf %226, %210 : vector<2x32xf32>
    %228 = vector.extract_strided_slice %223 {offsets = [0, 0], sizes = [2, 32], strides = [1, 1]} : vector<2x96xf32> to vector<2x32xf32>
    %229 = arith.mulf %228, %225 : vector<2x32xf32>
    %230 = arith.addf %227, %229 : vector<2x32xf32>
    %231 = vector.extract_strided_slice %223 {offsets = [0, 64], sizes = [2, 32], strides = [1, 1]} : vector<2x96xf32> to vector<2x32xf32>
    %232 = math.tanh %230 : vector<2x32xf32>
    %233 = arith.mulf %231, %232 : vector<2x32xf32>
    %234 = vector.extract_strided_slice %70 {offsets = [14, 128], sizes = [2, 128], strides = [1, 1]} : vector<16x256xf32> to vector<2x128xf32>
    %235 = vector.extract_strided_slice %234 {offsets = [0, 0], sizes = [2, 96], strides = [1, 1]} : vector<2x128xf32> to vector<2x96xf32>
    %236 = arith.negf %235 : vector<2x96xf32>
    %237 = math.exp %236 : vector<2x96xf32>
    %cst_73 = arith.constant 1.000000e+00 : f32
    %238 = vector.broadcast %cst_73 : f32 to vector<2x96xf32>
    %239 = arith.addf %238, %237 : vector<2x96xf32>
    %240 = arith.divf %238, %239 : vector<2x96xf32>
    %241 = vector.extract_strided_slice %234 {offsets = [0, 96], sizes = [2, 32], strides = [1, 1]} : vector<2x128xf32> to vector<2x32xf32>
    %242 = math.tanh %241 : vector<2x32xf32>
    %243 = vector.extract_strided_slice %240 {offsets = [0, 64], sizes = [2, 32], strides = [1, 1]} : vector<2x96xf32> to vector<2x32xf32>
    %244 = vector.extract_strided_slice %240 {offsets = [0, 0], sizes = [2, 32], strides = [1, 1]} : vector<2x96xf32> to vector<2x32xf32>
    %245 = arith.mulf %244, %242 : vector<2x32xf32>
    %246 = math.tanh %245 : vector<2x32xf32>
    %247 = arith.mulf %243, %246 : vector<2x32xf32>
    %c64 = arith.constant 64 : index
    %c0_74 = arith.constant 0 : index
    %248 = vector.load %arg3[%c64, %c0_74] : memref<128x256xbf16, #tpu.memory_space<vmem>>, vector<32x4xbf16>
    %c96 = arith.constant 96 : index
    %c0_75 = arith.constant 0 : index
    %249 = vector.load %arg3[%c96, %c0_75] : memref<128x256xbf16, #tpu.memory_space<vmem>>, vector<32x4xbf16>
    %250 = arith.truncf %233 : vector<2x32xf32> to vector<2x32xbf16>
    %cst_76 = arith.constant dense<0.000000e+00> : vector<2x4xf32>
    %251 = tpu.matmul %250, %248, %cst_76 {dimension_numbers = #tpu.dot_dimension_numbers<[1], [0], [0], [1], [0, 0, 1, 1], [], []>} : vector<2x32xbf16>, vector<32x4xbf16>, vector<2x4xf32> -> vector<2x4xf32>
    %252 = arith.truncf %247 : vector<2x32xf32> to vector<2x32xbf16>
    %cst_77 = arith.constant dense<0.000000e+00> : vector<2x4xf32>
    %253 = tpu.matmul %252, %249, %cst_77 {dimension_numbers = #tpu.dot_dimension_numbers<[1], [0], [0], [1], [0, 0, 1, 1], [], []>} : vector<2x32xbf16>, vector<32x4xbf16>, vector<2x4xf32> -> vector<2x4xf32>
    %254 = arith.addf %251, %253 : vector<2x4xf32>
    %c1_78 = arith.constant 1 : index
    %c0_79 = arith.constant 0 : index
    %255 = vector.load %arg4[%c1_78, %c0_79] : memref<2x256xf32, #tpu.memory_space<vmem>>, vector<1x4xf32>
    %256 = vector.broadcast %255 : vector<1x4xf32> to vector<2x4xf32>
    %257 = arith.addf %254, %256 : vector<2x4xf32>
    %c0_80 = arith.constant 0 : index
    %c0_81 = arith.constant 0 : index
    %258 = vector.load %arg5[%c0_80, %c0_81] : memref<2x4xf32, #tpu.memory_space<vmem>>, vector<2x4xf32>
    tpu.vector_store %arg5[%c0_80, %c0_81], %257 {strides = array<i32>} : memref<2x4xf32, #tpu.memory_space<vmem>>, vector<2x4xf32>,
    return
  }
  func.func @transform_0(%arg0: i32, %arg1: memref<16xi32, #tpu.memory_space<smem>>) -> (i32, i32) {
    %c0_i32 = arith.constant 0 : i32
    %c0_i32_0 = arith.constant 0 : i32
    %c0_i32_1 = arith.constant 0 : i32
    return %c0_i32, %c0_i32_0 : i32, i32
  }
  func.func @transform_1(%arg0: i32, %arg1: memref<16xi32, #tpu.memory_space<smem>>) -> (i32, i32) {
    %c0_i32 = arith.constant 0 : i32
    %c0_i32_0 = arith.constant 0 : i32
    %c0_i32_1 = arith.constant 0 : i32
    return %c0_i32, %c0_i32_0 : i32, i32
  }
  func.func @transform_2(%arg0: i32, %arg1: memref<16xi32, #tpu.memory_space<smem>>) -> (i32, i32) {
    %c0_i32 = arith.constant 0 : i32
    %c0_i32_0 = arith.constant 0 : i32
    %c0_i32_1 = arith.constant 0 : i32
    return %c0_i32, %c0_i32_0 : i32, i32
  }
  func.func @transform_3(%arg0: i32, %arg1: memref<16xi32, #tpu.memory_space<smem>>) -> (i32, i32) {
    %c0_i32 = arith.constant 0 : i32
    %c0_i32_0 = arith.constant 0 : i32
    %c0_i32_1 = arith.constant 0 : i32
    return %c0_i32, %c0_i32_0 : i32, i32
  }
}

</mosaic_0001>

<llo_original>
// kernel: tpu_custom_call.1
$region0: #{tpu_custom_call.1}
  #allocation0 [shape = 'u32[]', space=smem, size = 0x4, offset = 0x4, fixed_abs, tag = 'smem constant byte address 0x4 - core index']
  #allocation1 [shape = 'u32[144,128]{1,0:T(1,128)}', space=vmem, size = 0x12000, scoped, tag = 'internal scratch']
  #allocation2 [shape = 'f32[16,32]{1,0:T(8,128)}', space=vmem, size = 0x2000, scoped, tag = 'scratch operand']
  #allocation3 [shape = 's32[1]{0}', space=sflag, size = 0x4, scoped, tag = 'scoped memory for tpu_custom_call.1']
  #allocation4 [shape = 'u8[512]{0}', space=smem, size = 0x200, scoped, tag = 'prefetched SMEM operand 0']
  %s0 = inlined_call_operand.vmem [shape: s32[16], index: 0, kind: input, shape index: {}]
  %s1 = inlined_call_operand.vmem [shape: f32[50,32], index: 1, kind: input, shape index: {}]
  %s2 = inlined_call_operand.hbm [shape: bf16[128,256], index: 2, kind: input, shape index: {}]
  %s3 = inlined_call_operand.vmem [shape: f32[2,256], index: 3, kind: input, shape index: {}]
  %s4 = inlined_call_operand.hbm [shape: f32[2,4], index: 4, kind: output, shape index: {}]
  %s5 = sld [smem:[#allocation0]]
  $region26: #{tpu_custom_call.1} parent=0
    _
  %s7 = ssub.s32 1, %s5
  %s8 = scalar_select 0, %s7, %s5
  %s9 = sshll.u32 %s0, 4
  %s10 = int_to_ptr.vmem [resolvable:$true] %s9
  %12 = dma.vmem_to_smem %s10, 16, [#allocation4], [#allocation3]
  %13 = dma.done [#allocation3], 16
  %14 = sfence
  $region1: #{tpu_custom_call.1} parent=0
    #allocation5 [shape = 'u8[65536]{0}', space=vmem, size = 0x10000, scoped, tag = 'input window, operand 2, single buffered']
    #allocation6 [shape = 's32[1]{0}', space=sflag, size = 0x4, scoped, tag = 'scoped memory for tpu_custom_call.1']
    #allocation7 [shape = 's32[1]{0}', space=sflag, size = 0x4, scoped, tag = 'scoped memory for tpu_custom_call.1']
    #allocation8 [shape = 'u8[1024]{0}', space=vmem, size = 0x400, scoped, tag = 'output window, operand 0, single buffered']
    %15 = vsyncpa [#allocation6], 0
    %16 = vsyncpa [#allocation7], 0
    // Predicated region
    $region2: #{tpu_custom_call.1} parent=1 // pred_check
      _
    $region3: #{tpu_custom_call.1} parent=1 // pred_check_branch
      %18 = sbr.rel (0) target = $region5
    $region4: #{tpu_custom_call.1} parent=1 // pred_region
      _
    $region5: #{tpu_custom_call.1} parent=1 // pred_fallthru
      _
    // Predicated region
    $region6: #{tpu_custom_call.1} parent=1 // pred_check
      _
    $region7: #{tpu_custom_call.1} parent=1 // pred_check_branch
      %20 = sbr.rel (0) target = $region9
    $region8: #{tpu_custom_call.1} parent=1 // pred_region
      %s22 = ssub.s32 2048, 2048
      %23 = vsyncadd [#allocation6], %s22
      %s24 = sshll.u32 [#allocation5], 4
      %s25 = int_to_ptr.vmem [resolvable:$true] %s24
      %30 = dma.hbm_to_vmem [thread:$0]  %s2, 2048, %s25, [#allocation6], 128, 128, 8
    $region9: #{tpu_custom_call.1} parent=1 // pred_fallthru
      _
    // Predicated region
    $region10: #{tpu_custom_call.1} parent=1 // pred_check
      _
    $region11: #{tpu_custom_call.1} parent=1 // pred_check_branch
      %32 = sbr.rel (0) target = $region13
    $region12: #{tpu_custom_call.1} parent=1 // pred_region
      _
    $region13: #{tpu_custom_call.1} parent=1 // pred_fallthru
      _
    // Predicated region
    $region14: #{tpu_custom_call.1} parent=1 // pred_check
      _
    $region15: #{tpu_custom_call.1} parent=1 // pred_check_branch
      %34 = sbr.rel (0) target = $region17
    $region16: #{tpu_custom_call.1} parent=1 // pred_region
      %35 = dma.done [#allocation6], 2048
    $region17: #{tpu_custom_call.1} parent=1 // pred_fallthru
      _
    %s37 = sld [smem:[#allocation4]]
    %s38 = scalar_lea.vmem %s1, %s37
    %v39 = vld [vmem:[%s38] sm:$0x1]
    %vm40 = vcmask 253952
    %41 = vst.msk [vmem:[#allocation2] sm:$0x1] %vm40, %v39
    %s42 = sld [smem:[#allocation4 + $0x8]]
    %s43 = scalar_lea.vmem %s1, %s42
    %v44 = vld [vmem:[%s43] sm:$0x1]
    %45 = vst.msk [vmem:[#allocation2 + $0x1] sm:$0x1] %vm40, %v44
    %s46 = sld [smem:[#allocation4 + $0x1]]
    %s47 = scalar_lea.vmem %s1, %s46
    %v48 = vld [vmem:[%s47] sm:$0x1]
    %49 = vst.msk [vmem:[#allocation2 + $0x2] sm:$0x1] %vm40, %v48
    %s50 = sld [smem:[#allocation4 + $0x9]]
    %s51 = scalar_lea.vmem %s1, %s50
    %v52 = vld [vmem:[%s51] sm:$0x1]
    %53 = vst.msk [vmem:[#allocation2 + $0x3] sm:$0x1] %vm40, %v52
    %s54 = sld [smem:[#allocation4 + $0x2]]
    %s55 = scalar_lea.vmem %s1, %s54
    %v56 = vld [vmem:[%s55] sm:$0x1]
    %57 = vst.msk [vmem:[#allocation2 + $0x4] sm:$0x1] %vm40, %v56
    %s58 = sld [smem:[#allocation4 + $0xa]]
    %s59 = scalar_lea.vmem %s1, %s58
    %v60 = vld [vmem:[%s59] sm:$0x1]
    %61 = vst.msk [vmem:[#allocation2 + $0x5] sm:$0x1] %vm40, %v60
    %s62 = sld [smem:[#allocation4 + $0x3]]
    %s63 = scalar_lea.vmem %s1, %s62
    %v64 = vld [vmem:[%s63] sm:$0x1]
    %65 = vst.msk [vmem:[#allocation2 + $0x6] sm:$0x1] %vm40, %v64
    %s66 = sld [smem:[#allocation4 + $0xb]]
    %s67 = scalar_lea.vmem %s1, %s66
    %v68 = vld [vmem:[%s67] sm:$0x1]
    %69 = vst.msk [vmem:[#allocation2 + $0x7] sm:$0x1] %vm40, %v68
    %s70 = sld [smem:[#allocation4 + $0x4]]
    %s71 = scalar_lea.vmem %s1, %s70
    %v72 = vld [vmem:[%s71] sm:$0x1]
    %73 = vst.msk [vmem:[#allocation2 + $0x8] sm:$0x1] %vm40, %v72
    %s74 = sld [smem:[#allocation4 + $0xc]]
    %s75 = scalar_lea.vmem %s1, %s74
    %v76 = vld [vmem:[%s75] sm:$0x1]
    %77 = vst.msk [vmem:[#allocation2 + $0x9] sm:$0x1] %vm40, %v76
    %s78 = sld [smem:[#allocation4 + $0x5]]
    %s79 = scalar_lea.vmem %s1, %s78
    %v80 = vld [vmem:[%s79] sm:$0x1]
    %81 = vst.msk [vmem:[#allocation2 + $0xa] sm:$0x1] %vm40, %v80
    %s82 = sld [smem:[#allocation4 + $0xd]]
    %s83 = scalar_lea.vmem %s1, %s82
    %v84 = vld [vmem:[%s83] sm:$0x1]
    %85 = vst.msk [vmem:[#allocation2 + $0xb] sm:$0x1] %vm40, %v84
    %s86 = sld [smem:[#allocation4 + $0x6]]
    %s87 = scalar_lea.vmem %s1, %s86
    %v88 = vld [vmem:[%s87] sm:$0x1]
    %89 = vst.msk [vmem:[#allocation2 + $0xc] sm:$0x1] %vm40, %v88
    %s90 = sld [smem:[#allocation4 + $0xe]]
    %s91 = scalar_lea.vmem %s1, %s90
    %v92 = vld [vmem:[%s91] sm:$0x1]
    %93 = vst.msk [vmem:[#allocation2 + $0xd] sm:$0x1] %vm40, %v92
    %s94 = sld [smem:[#allocation4 + $0x7]]
    %s95 = scalar_lea.vmem %s1, %s94
    %v96 = vld [vmem:[%s95] sm:$0x1]
    %97 = vst.msk [vmem:[#allocation2 + $0xe] sm:$0x1] %vm40, %v96
    %s98 = sld [smem:[#allocation4 + $0xf]]
    %s99 = scalar_lea.vmem %s1, %s98
    %v100 = vld [vmem:[%s99] sm:$0x1]
    %101 = vst.msk [vmem:[#allocation2 + $0xf] sm:$0x1] %vm40, %v100
    %v102 = vld [vmem:[#allocation2] sm:$0xff]
    %v103 = vld [vmem:[#allocation2 + $0x8] sm:$0xff]
    %v104 = vpack.c.bf16 %v103, %v102
    %v105 = vld [vmem:[#allocation5] sm:$0xff]
    %v106 = vld [vmem:[#allocation5 + $0x8] sm:$0xff]
    %v107 = vld [vmem:[#allocation5 + $0x10] sm:$0xff]
    %v108 = vld [vmem:[#allocation5 + $0x18] sm:$0xff]
    %v109 = vld [vmem:[%s3] ss:$2 sm:$0x3]
    %v111 = vlaneseq
    %v112 = vshrl.u32 %v111, 7
    %v113 = vsub.s32 0, %v112
    %v114 = vrot.slane %v109, %v113
    %v115 = vlaneseq
    %v116 = vshrl.u32 %v115, 7
    %v117 = vsub.s32 1, %v116
    %v118 = vrot.slane %v109, %v117
    %v125 = vunpack.c.l.b16 %v105
    %v126 = vunpack.c.h.b16 %v105
    %v127 = vunpack.c.l.b16 %v106
    %v128 = vunpack.c.h.b16 %v106
    %v129 = vunpack.c.l.b16 %v107
    %v130 = vunpack.c.h.b16 %v107
    %v131 = vunpack.c.l.b16 %v108
    %v132 = vunpack.c.h.b16 %v108
    %v133 = vpack.c.b16 %v127, %v125
    %v134 = vpack.c.b16 %v128, %v126
    %v135 = vpack.c.b16 %v131, %v129
    %v136 = vpack.c.b16 %v132, %v130
    %vm141 = vcmask 261120
    %v143 = vsel %vm141, %v104, 0
    %145 = vmatprep.subr.bf16.mxu0 %v134
    %146 = vmatpush1.bf16.msra.mxu0 %v133
    %147 = vmatprep.subr.bf16.mxu0 %v136
    %148 = vmatpush1.bf16.msra.mxu0 %v135
    %149 = vmatprep.subr.bf16.mxu0 0
    %150 = vmatpush1.bf16.msra.mxu0 0
    %151 = vmatprep.subr.bf16.mxu0 0
    %152 = vmatpush1.bf16.msra.mxu0 0
    %153 = vmatprep.subr.bf16.mxu0 0
    %154 = vmatpush1.bf16.msra.mxu0 0
    %155 = vmatprep.subr.bf16.mxu0 0
    %156 = vmatpush1.bf16.msra.mxu0 0
    %157 = vmatprep.subr.bf16.mxu0 0
    %158 = vmatpush1.bf16.msra.mxu0 0
    %159 = vmatprep.subr.bf16.mxu0 0
    %160 = vmatpush1.bf16.msra.mxu0 0
    %161 = vmatprep.subr.bf16.mxu0 0
    %162 = vmatpush1.bf16.msra.mxu0 0
    %163 = vmatprep.subr.bf16.mxu0 0
    %164 = vmatpush1.bf16.msra.mxu0 0
    %165 = vmatprep.subr.bf16.mxu0 0
    %166 = vmatpush1.bf16.msra.mxu0 0
    %167 = vmatprep.subr.bf16.mxu0 0
    %168 = vmatpush1.bf16.msra.mxu0 0
    %169 = vmatprep.subr.bf16.mxu0 0
    %170 = vmatpush1.bf16.msra.mxu0 0
    %171 = vmatprep.subr.bf16.mxu0 0
    %172 = vmatpush1.bf16.msra.mxu0 0
    %173 = vmatprep.subr.bf16.mxu0 0
    %174 = vmatpush1.bf16.msra.mxu0 0
    %175 = vmatprep.subr.bf16.mxu0 0
    %176 = vmatpush1.bf16.msra.mxu0 0
    %177 = vmatprep.mubr.bf16.mxu0 0
    %178 = vmatmul.mubr.bf16.gmra.mrb[0].mxu0 %v143
    %v179 = vpop.f32.mrb[0].mxu0
    %v180 = vadd.f32 %v114, %v179
    %v181 = vpop.f32.mrb[0].mxu0
    %v182 = vpop.f32.mrb[0].mxu0
    %v183 = vadd.f32 %v114, %v182
    %v184 = vpop.f32.mrb[0].mxu0
    %v185 = vadd.f32 %v118, %v184
    %186 = vdwg.mxu0
    %v187 = vld [vmem:[#allocation5 + $0x20] sm:$0xf]
    %v188 = vld [vmem:[#allocation5 + $0x28] sm:$0xf]
    %v189 = vld [vmem:[#allocation5 + $0x30] sm:$0xf]
    %v190 = vld [vmem:[#allocation5 + $0x38] sm:$0xf]
    %v195 = vunpack.c.l.b16 %v187
    %v196 = vunpack.c.l.b16 %v188
    %v197 = vunpack.c.l.b16 %v189
    %v198 = vunpack.c.l.b16 %v190
    %v199 = vpack.c.b16 %v196, %v195
    %v200 = vpack.c.b16 %v198, %v197
    %v204 = vsel %vm141, 0, 0
    %206 = vmatprep.subr.bf16.mxu0 0
    %207 = vmatpush1.bf16.msra.mxu0 %v199
    %208 = vmatprep.subr.bf16.mxu0 0
    %209 = vmatpush1.bf16.msra.mxu0 %v200
    %210 = vmatprep.subr.bf16.mxu0 0
    %211 = vmatpush1.bf16.msra.mxu0 0
    %212 = vmatprep.subr.bf16.mxu0 0
    %213 = vmatpush1.bf16.msra.mxu0 0
    %214 = vmatprep.subr.bf16.mxu0 0
    %215 = vmatpush1.bf16.msra.mxu0 0
    %216 = vmatprep.subr.bf16.mxu0 0
    %217 = vmatpush1.bf16.msra.mxu0 0
    %218 = vmatprep.subr.bf16.mxu0 0
    %219 = vmatpush1.bf16.msra.mxu0 0
    %220 = vmatprep.subr.bf16.mxu0 0
    %221 = vmatpush1.bf16.msra.mxu0 0
    %222 = vmatprep.subr.bf16.mxu0 0
    %223 = vmatpush1.bf16.msra.mxu0 0
    %224 = vmatprep.subr.bf16.mxu0 0
    %225 = vmatpush1.bf16.msra.mxu0 0
    %226 = vmatprep.subr.bf16.mxu0 0
    %227 = vmatpush1.bf16.msra.mxu0 0
    %228 = vmatprep.subr.bf16.mxu0 0
    %229 = vmatpush1.bf16.msra.mxu0 0
    %230 = vmatprep.subr.bf16.mxu0 0
    %231 = vmatpush1.bf16.msra.mxu0 0
    %232 = vmatprep.subr.bf16.mxu0 0
    %233 = vmatpush1.bf16.msra.mxu0 0
    %234 = vmatprep.subr.bf16.mxu0 0
    %235 = vmatpush1.bf16.msra.mxu0 0
    %236 = vmatprep.subr.bf16.mxu0 0
    %237 = vmatpush1.bf16.msra.mxu0 0
    %238 = vmatprep.mubr.bf16.mxu0 0
    %239 = vmatmul.mubr.bf16.gmra.mrb[0].mxu0 %v204
    %v240 = vpop.f32.mrb[0].mxu0
    %v241 = vadd.f32 0.0, %v240
    %v242 = vpop.f32.mrb[0].mxu0
    %v243 = vpop.f32.mrb[0].mxu0
    %v244 = vpop.f32.mrb[0].mxu0
    %245 = vdwg.mxu0
    %v246 = vadd.f32 %v180, %v241
    %v247 = vxor.u32 %v246, 2147483648
    %v248 = vmul.f32 %v247, 1.442695
    %v249 = vpow.pop %v248
    %v250 = vadd.f32 %v249, 1.0
    %v251 = vrcp.pop %v250
    %v252 = vmul.f32 1.0, %v251
    %v253 = vtanh.pop %v246
    %v254 = vmul.f32 %v252, 0.0
    %256 = vrot.lane.b32.xlu0 %v253, 32
    %v257 = vpop.permute.xlu0 %256
    %v259 = vmul.f32 %v252, %v257
    %261 = vrot.lane.b32.xlu0 %v259, 32
    %v262 = vpop.permute.xlu0 %261
    %v264 = vadd.f32 %v254, %v262
    %v265 = vtanh.pop %v264
    %267 = vrot.lane.b32.xlu0 %v265, 32
    %v268 = vpop.permute.xlu0 %267
    %v270 = vmul.f32 %v252, %v268
    %v271 = vpack.c.bf16 %v270, %v270
    %273 = vrot.lane.b32.xlu0 %v271, 64
    %v274 = vpop.permute.xlu0 %273
    %v276 = vsel %vm141, %v274, 0
    %278 = vmatprep.subr.bf16.mxu0 0
    %279 = vmatpush1.bf16.msra.mxu0 %v199
    %280 = vmatprep.subr.bf16.mxu0 0
    %281 = vmatpush1.bf16.msra.mxu0 %v200
    %282 = vmatprep.subr.bf16.mxu0 0
    %283 = vmatpush1.bf16.msra.mxu0 0
    %284 = vmatprep.subr.bf16.mxu0 0
    %285 = vmatpush1.bf16.msra.mxu0 0
    %286 = vmatprep.subr.bf16.mxu0 0
    %287 = vmatpush1.bf16.msra.mxu0 0
    %288 = vmatprep.subr.bf16.mxu0 0
    %289 = vmatpush1.bf16.msra.mxu0 0
    %290 = vmatprep.subr.bf16.mxu0 0
    %291 = vmatpush1.bf16.msra.mxu0 0
    %292 = vmatprep.subr.bf16.mxu0 0
    %293 = vmatpush1.bf16.msra.mxu0 0
    %294 = vmatprep.subr.bf16.mxu0 0
    %295 = vmatpush1.bf16.msra.mxu0 0
    %296 = vmatprep.subr.bf16.mxu0 0
    %297 = vmatpush1.bf16.msra.mxu0 0
    %298 = vmatprep.subr.bf16.mxu0 0
    %299 = vmatpush1.bf16.msra.mxu0 0
    %300 = vmatprep.subr.bf16.mxu0 0
    %301 = vmatpush1.bf16.msra.mxu0 0
    %302 = vmatprep.subr.bf16.mxu0 0
    %303 = vmatpush1.bf16.msra.mxu0 0
    %304 = vmatprep.subr.bf16.mxu0 0
    %305 = vmatpush1.bf16.msra.mxu0 0
    %306 = vmatprep.subr.bf16.mxu0 0
    %307 = vmatpush1.bf16.msra.mxu0 0
    %308 = vmatprep.subr.bf16.mxu0 0
    %309 = vmatpush1.bf16.msra.mxu0 0
    %310 = vmatprep.mubr.bf16.mxu0 0
    %311 = vmatmul.mubr.bf16.gmra.mrb[0].mxu0 %v276
    %v312 = vpop.f32.mrb[0].mxu0
    %v313 = vadd.f32 0.0, %v312
    %v314 = vpop.f32.mrb[0].mxu0
    %v315 = vpop.f32.mrb[0].mxu0
    %v316 = vpop.f32.mrb[0].mxu0
    %317 = vdwg.mxu0
    %v319 = vrot.slane %v313, 6
    %v321 = vadd.f32 %v180, %v319
    %v322 = vxor.u32 %v321, 2147483648
    %v323 = vmul.f32 %v322, 1.442695
    %v324 = vpow.pop %v323
    %v325 = vadd.f32 %v324, 1.0
    %v326 = vrcp.pop %v325
    %v327 = vmul.f32 1.0, %v326
    %v328 = vtanh.pop %v321
    %v330 = vrot.slane %v264, 6
    %v332 = vmul.f32 %v327, %v330
    %334 = vrot.lane.b32.xlu0 %v328, 32
    %v335 = vpop.permute.xlu0 %334
    %v337 = vmul.f32 %v327, %v335
    %339 = vrot.lane.b32.xlu0 %v337, 32
    %v340 = vpop.permute.xlu0 %339
    %v342 = vadd.f32 %v332, %v340
    %v343 = vtanh.pop %v342
    %345 = vrot.lane.b32.xlu0 %v343, 32
    %v346 = vpop.permute.xlu0 %345
    %v348 = vmul.f32 %v327, %v346
    %v349 = vpack.c.bf16 %v348, %v348
    %v351 = vrot.slane %v349, 1
    %352 = vrot.lane.b32.xlu0 %v351, 64
    %v353 = vpop.permute.xlu0 %352
    %v355 = vsel %vm141, %v353, 0
    %357 = vmatprep.subr.bf16.mxu0 0
    %358 = vmatpush1.bf16.msra.mxu0 %v199
    %359 = vmatprep.subr.bf16.mxu0 0
    %360 = vmatpush1.bf16.msra.mxu0 %v200
    %361 = vmatprep.subr.bf16.mxu0 0
    %362 = vmatpush1.bf16.msra.mxu0 0
    %363 = vmatprep.subr.bf16.mxu0 0
    %364 = vmatpush1.bf16.msra.mxu0 0
    %365 = vmatprep.subr.bf16.mxu0 0
    %366 = vmatpush1.bf16.msra.mxu0 0
    %367 = vmatprep.subr.bf16.mxu0 0
    %368 = vmatpush1.bf16.msra.mxu0 0
    %369 = vmatprep.subr.bf16.mxu0 0
    %370 = vmatpush1.bf16.msra.mxu0 0
    %371 = vmatprep.subr.bf16.mxu0 0
    %372 = vmatpush1.bf16.msra.mxu0 0
    %373 = vmatprep.subr.bf16.mxu0 0
    %374 = vmatpush1.bf16.msra.mxu0 0
    %375 = vmatprep.subr.bf16.mxu0 0
    %376 = vmatpush1.bf16.msra.mxu0 0
    %377 = vmatprep.subr.bf16.mxu0 0
    %378 = vmatpush1.bf16.msra.mxu0 0
    %379 = vmatprep.subr.bf16.mxu0 0
    %380 = vmatpush1.bf16.msra.mxu0 0
    %381 = vmatprep.subr.bf16.mxu0 0
    %382 = vmatpush1.bf16.msra.mxu0 0
    %383 = vmatprep.subr.bf16.mxu0 0
    %384 = vmatpush1.bf16.msra.mxu0 0
    %385 = vmatprep.subr.bf16.mxu0 0
    %386 = vmatpush1.bf16.msra.mxu0 0
    %387 = vmatprep.subr.bf16.mxu0 0
    %388 = vmatpush1.bf16.msra.mxu0 0
    %389 = vmatprep.mubr.bf16.mxu0 0
    %390 = vmatmul.mubr.bf16.gmra.mrb[0].mxu0 %v355
    %v391 = vpop.f32.mrb[0].mxu0
    %v392 = vadd.f32 0.0, %v391
    %v393 = vpop.f32.mrb[0].mxu0
    %v394 = vpop.f32.mrb[0].mxu0
    %v395 = vpop.f32.mrb[0].mxu0
    %396 = vdwg.mxu0
    %v398 = vrot.slane %v392, 4
    %v400 = vadd.f32 %v180, %v398
    %v401 = vxor.u32 %v400, 2147483648
    %v402 = vmul.f32 %v401, 1.442695
    %v403 = vpow.pop %v402
    %v404 = vadd.f32 %v403, 1.0
    %v405 = vrcp.pop %v404
    %v406 = vmul.f32 1.0, %v405
    %v407 = vtanh.pop %v400
    %v409 = vrot.slane %v342, 6
    %v411 = vmul.f32 %v406, %v409
    %413 = vrot.lane.b32.xlu0 %v407, 32
    %v414 = vpop.permute.xlu0 %413
    %v416 = vmul.f32 %v406, %v414
    %418 = vrot.lane.b32.xlu0 %v416, 32
    %v419 = vpop.permute.xlu0 %418
    %v421 = vadd.f32 %v411, %v419
    %v422 = vtanh.pop %v421
    %424 = vrot.lane.b32.xlu0 %v422, 32
    %v425 = vpop.permute.xlu0 %424
    %v427 = vmul.f32 %v406, %v425
    %v428 = vpack.c.bf16 %v427, %v427
    %v430 = vrot.slane %v428, 2
    %431 = vrot.lane.b32.xlu0 %v430, 64
    %v432 = vpop.permute.xlu0 %431
    %v434 = vsel %vm141, %v432, 0
    %436 = vmatprep.subr.bf16.mxu0 0
    %437 = vmatpush1.bf16.msra.mxu0 %v199
    %438 = vmatprep.subr.bf16.mxu0 0
    %439 = vmatpush1.bf16.msra.mxu0 %v200
    %440 = vmatprep.subr.bf16.mxu0 0
    %441 = vmatpush1.bf16.msra.mxu0 0
    %442 = vmatprep.subr.bf16.mxu0 0
    %443 = vmatpush1.bf16.msra.mxu0 0
    %444 = vmatprep.subr.bf16.mxu0 0
    %445 = vmatpush1.bf16.msra.mxu0 0
    %446 = vmatprep.subr.bf16.mxu0 0
    %447 = vmatpush1.bf16.msra.mxu0 0
    %448 = vmatprep.subr.bf16.mxu0 0
    %449 = vmatpush1.bf16.msra.mxu0 0
    %450 = vmatprep.subr.bf16.mxu0 0
    %451 = vmatpush1.bf16.msra.mxu0 0
    %452 = vmatprep.subr.bf16.mxu0 0
    %453 = vmatpush1.bf16.msra.mxu0 0
    %454 = vmatprep.subr.bf16.mxu0 0
    %455 = vmatpush1.bf16.msra.mxu0 0
    %456 = vmatprep.subr.bf16.mxu0 0
    %457 = vmatpush1.bf16.msra.mxu0 0
    %458 = vmatprep.subr.bf16.mxu0 0
    %459 = vmatpush1.bf16.msra.mxu0 0
    %460 = vmatprep.subr.bf16.mxu0 0
    %461 = vmatpush1.bf16.msra.mxu0 0
    %462 = vmatprep.subr.bf16.mxu0 0
    %463 = vmatpush1.bf16.msra.mxu0 0
    %464 = vmatprep.subr.bf16.mxu0 0
    %465 = vmatpush1.bf16.msra.mxu0 0
    %466 = vmatprep.subr.bf16.mxu0 0
    %467 = vmatpush1.bf16.msra.mxu0 0
    %468 = vmatprep.mubr.bf16.mxu0 0
    %469 = vmatmul.mubr.bf16.gmra.mrb[0].mxu0 %v434
    %v470 = vpop.f32.mrb[0].mxu0
    %v471 = vadd.f32 0.0, %v470
    %v472 = vpop.f32.mrb[0].mxu0
    %v473 = vpop.f32.mrb[0].mxu0
    %v474 = vpop.f32.mrb[0].mxu0
    %475 = vdwg.mxu0
    %v477 = vrot.slane %v471, 2
    %v479 = vadd.f32 %v180, %v477
    %v480 = vxor.u32 %v479, 2147483648
    %v481 = vmul.f32 %v480, 1.442695
    %v482 = vpow.pop %v481
    %v483 = vadd.f32 %v482, 1.0
    %v484 = vrcp.pop %v483
    %v485 = vmul.f32 1.0, %v484
    %v486 = vtanh.pop %v479
    %v488 = vrot.slane %v421, 6
    %v490 = vmul.f32 %v485, %v488
    %492 = vrot.lane.b32.xlu0 %v486, 32
    %v493 = vpop.permute.xlu0 %492
    %v495 = vmul.f32 %v485, %v493
    %497 = vrot.lane.b32.xlu0 %v495, 32
    %v498 = vpop.permute.xlu0 %497
    %v500 = vadd.f32 %v490, %v498
    %v501 = vtanh.pop %v500
    %503 = vrot.lane.b32.xlu0 %v501, 32
    %v504 = vpop.permute.xlu0 %503
    %v506 = vmul.f32 %v485, %v504
    %v507 = vpack.c.bf16 %v506, %v506
    %v509 = vrot.slane %v507, 3
    %510 = vrot.lane.b32.xlu0 %v509, 64
    %v511 = vpop.permute.xlu0 %510
    %v513 = vsel %vm141, %v511, 0
    %515 = vmatprep.subr.bf16.mxu0 0
    %516 = vmatpush1.bf16.msra.mxu0 %v199
    %517 = vmatprep.subr.bf16.mxu0 0
    %518 = vmatpush1.bf16.msra.mxu0 %v200
    %519 = vmatprep.subr.bf16.mxu0 0
    %520 = vmatpush1.bf16.msra.mxu0 0
    %521 = vmatprep.subr.bf16.mxu0 0
    %522 = vmatpush1.bf16.msra.mxu0 0
    %523 = vmatprep.subr.bf16.mxu0 0
    %524 = vmatpush1.bf16.msra.mxu0 0
    %525 = vmatprep.subr.bf16.mxu0 0
    %526 = vmatpush1.bf16.msra.mxu0 0
    %527 = vmatprep.subr.bf16.mxu0 0
    %528 = vmatpush1.bf16.msra.mxu0 0
    %529 = vmatprep.subr.bf16.mxu0 0
    %530 = vmatpush1.bf16.msra.mxu0 0
    %531 = vmatprep.subr.bf16.mxu0 0
    %532 = vmatpush1.bf16.msra.mxu0 0
    %533 = vmatprep.subr.bf16.mxu0 0
    %534 = vmatpush1.bf16.msra.mxu0 0
    %535 = vmatprep.subr.bf16.mxu0 0
    %536 = vmatpush1.bf16.msra.mxu0 0
    %537 = vmatprep.subr.bf16.mxu0 0
    %538 = vmatpush1.bf16.msra.mxu0 0
    %539 = vmatprep.subr.bf16.mxu0 0
    %540 = vmatpush1.bf16.msra.mxu0 0
    %541 = vmatprep.subr.bf16.mxu0 0
    %542 = vmatpush1.bf16.msra.mxu0 0
    %543 = vmatprep.subr.bf16.mxu0 0
    %544 = vmatpush1.bf16.msra.mxu0 0
    %545 = vmatprep.subr.bf16.mxu0 0
    %546 = vmatpush1.bf16.msra.mxu0 0
    %547 = vmatprep.mubr.bf16.mxu0 0
    %548 = vmatmul.mubr.bf16.gmra.mrb[0].mxu0 %v513
    %v549 = vpop.f32.mrb[0].mxu0
    %v550 = vadd.f32 0.0, %v549
    %v551 = vpop.f32.mrb[0].mxu0
    %v552 = vpop.f32.mrb[0].mxu0
    %v553 = vpop.f32.mrb[0].mxu0
    %554 = vdwg.mxu0
    %v555 = vadd.f32 %v183, %v550
    %v556 = vxor.u32 %v555, 2147483648
    %v557 = vmul.f32 %v556, 1.442695
    %v558 = vpow.pop %v557
    %v559 = vadd.f32 %v558, 1.0
    %v560 = vrcp.pop %v559
    %v561 = vmul.f32 1.0, %v560
    %v562 = vtanh.pop %v555
    %v564 = vrot.slane %v500, 6
    %v566 = vmul.f32 %v561, %v564
    %568 = vrot.lane.b32.xlu0 %v562, 32
    %v569 = vpop.permute.xlu0 %568
    %v571 = vmul.f32 %v561, %v569
    %573 = vrot.lane.b32.xlu0 %v571, 32
    %v574 = vpop.permute.xlu0 %573
    %v576 = vadd.f32 %v566, %v574
    %v577 = vtanh.pop %v576
    %579 = vrot.lane.b32.xlu0 %v577, 32
    %v580 = vpop.permute.xlu0 %579
    %v582 = vmul.f32 %v561, %v580
    %v583 = vpack.c.bf16 %v582, %v582
    %585 = vrot.lane.b32.xlu0 %v583, 64
    %v586 = vpop.permute.xlu0 %585
    %v588 = vsel %vm141, %v586, 0
    %590 = vmatprep.subr.bf16.mxu0 0
    %591 = vmatpush1.bf16.msra.mxu0 %v199
    %592 = vmatprep.subr.bf16.mxu0 0
    %593 = vmatpush1.bf16.msra.mxu0 %v200
    %594 = vmatprep.subr.bf16.mxu0 0
    %595 = vmatpush1.bf16.msra.mxu0 0
    %596 = vmatprep.subr.bf16.mxu0 0
    %597 = vmatpush1.bf16.msra.mxu0 0
    %598 = vmatprep.subr.bf16.mxu0 0
    %599 = vmatpush1.bf16.msra.mxu0 0
    %600 = vmatprep.subr.bf16.mxu0 0
    %601 = vmatpush1.bf16.msra.mxu0 0
    %602 = vmatprep.subr.bf16.mxu0 0
    %603 = vmatpush1.bf16.msra.mxu0 0
    %604 = vmatprep.subr.bf16.mxu0 0
    %605 = vmatpush1.bf16.msra.mxu0 0
    %606 = vmatprep.subr.bf16.mxu0 0
    %607 = vmatpush1.bf16.msra.mxu0 0
    %608 = vmatprep.subr.bf16.mxu0 0
    %609 = vmatpush1.bf16.msra.mxu0 0
    %610 = vmatprep.subr.bf16.mxu0 0
    %611 = vmatpush1.bf16.msra.mxu0 0
    %612 = vmatprep.subr.bf16.mxu0 0
    %613 = vmatpush1.bf16.msra.mxu0 0
    %614 = vmatprep.subr.bf16.mxu0 0
    %615 = vmatpush1.bf16.msra.mxu0 0
    %616 = vmatprep.subr.bf16.mxu0 0
    %617 = vmatpush1.bf16.msra.mxu0 0
    %618 = vmatprep.subr.bf16.mxu0 0
    %619 = vmatpush1.bf16.msra.mxu0 0
    %620 = vmatprep.subr.bf16.mxu0 0
    %621 = vmatpush1.bf16.msra.mxu0 0
    %622 = vmatprep.mubr.bf16.mxu0 0
    %623 = vmatmul.mubr.bf16.gmra.mrb[0].mxu0 %v588
    %v624 = vpop.f32.mrb[0].mxu0
    %v625 = vadd.f32 0.0, %v624
    %v626 = vpop.f32.mrb[0].mxu0
    %v627 = vpop.f32.mrb[0].mxu0
    %v628 = vpop.f32.mrb[0].mxu0
    %629 = vdwg.mxu0
    %v631 = vrot.slane %v625, 6
    %v633 = vadd.f32 %v183, %v631
    %v634 = vxor.u32 %v633, 2147483648
    %v635 = vmul.f32 %v634, 1.442695
    %v636 = vpow.pop %v635
    %v637 = vadd.f32 %v636, 1.0
    %v638 = vrcp.pop %v637
    %v639 = vmul.f32 1.0, %v638
    %v640 = vtanh.pop %v633
    %v642 = vrot.slane %v576, 6
    %v644 = vmul.f32 %v639, %v642
    %646 = vrot.lane.b32.xlu0 %v640, 32
    %v647 = vpop.permute.xlu0 %646
    %v649 = vmul.f32 %v639, %v647
    %651 = vrot.lane.b32.xlu0 %v649, 32
    %v652 = vpop.permute.xlu0 %651
    %v654 = vadd.f32 %v644, %v652
    %v655 = vtanh.pop %v654
    %657 = vrot.lane.b32.xlu0 %v655, 32
    %v658 = vpop.permute.xlu0 %657
    %v660 = vmul.f32 %v639, %v658
    %v661 = vpack.c.bf16 %v660, %v660
    %v663 = vrot.slane %v661, 1
    %664 = vrot.lane.b32.xlu0 %v663, 64
    %v665 = vpop.permute.xlu0 %664
    %v667 = vsel %vm141, %v665, 0
    %669 = vmatprep.subr.bf16.mxu0 0
    %670 = vmatpush1.bf16.msra.mxu0 %v199
    %671 = vmatprep.subr.bf16.mxu0 0
    %672 = vmatpush1.bf16.msra.mxu0 %v200
    %673 = vmatprep.subr.bf16.mxu0 0
    %674 = vmatpush1.bf16.msra.mxu0 0
    %675 = vmatprep.subr.bf16.mxu0 0
    %676 = vmatpush1.bf16.msra.mxu0 0
    %677 = vmatprep.subr.bf16.mxu0 0
    %678 = vmatpush1.bf16.msra.mxu0 0
    %679 = vmatprep.subr.bf16.mxu0 0
    %680 = vmatpush1.bf16.msra.mxu0 0
    %681 = vmatprep.subr.bf16.mxu0 0
    %682 = vmatpush1.bf16.msra.mxu0 0
    %683 = vmatprep.subr.bf16.mxu0 0
    %684 = vmatpush1.bf16.msra.mxu0 0
    %685 = vmatprep.subr.bf16.mxu0 0
    %686 = vmatpush1.bf16.msra.mxu0 0
    %687 = vmatprep.subr.bf16.mxu0 0
    %688 = vmatpush1.bf16.msra.mxu0 0
    %689 = vmatprep.subr.bf16.mxu0 0
    %690 = vmatpush1.bf16.msra.mxu0 0
    %691 = vmatprep.subr.bf16.mxu0 0
    %692 = vmatpush1.bf16.msra.mxu0 0
    %693 = vmatprep.subr.bf16.mxu0 0
    %694 = vmatpush1.bf16.msra.mxu0 0
    %695 = vmatprep.subr.bf16.mxu0 0
    %696 = vmatpush1.bf16.msra.mxu0 0
    %697 = vmatprep.subr.bf16.mxu0 0
    %698 = vmatpush1.bf16.msra.mxu0 0
    %699 = vmatprep.subr.bf16.mxu0 0
    %700 = vmatpush1.bf16.msra.mxu0 0
    %701 = vmatprep.mubr.bf16.mxu0 0
    %702 = vmatmul.mubr.bf16.gmra.mrb[0].mxu0 %v667
    %v703 = vpop.f32.mrb[0].mxu0
    %v704 = vadd.f32 0.0, %v703
    %v705 = vpop.f32.mrb[0].mxu0
    %v706 = vpop.f32.mrb[0].mxu0
    %v707 = vpop.f32.mrb[0].mxu0
    %708 = vdwg.mxu0
    %v710 = vrot.slane %v704, 4
    %v712 = vadd.f32 %v183, %v710
    %v713 = vxor.u32 %v712, 2147483648
    %v714 = vmul.f32 %v713, 1.442695
    %v715 = vpow.pop %v714
    %v716 = vadd.f32 %v715, 1.0
    %v717 = vrcp.pop %v716
    %v718 = vmul.f32 1.0, %v717
    %v719 = vtanh.pop %v712
    %v721 = vrot.slane %v654, 6
    %v723 = vmul.f32 %v718, %v721
    %725 = vrot.lane.b32.xlu0 %v719, 32
    %v726 = vpop.permute.xlu0 %725
    %v728 = vmul.f32 %v718, %v726
    %730 = vrot.lane.b32.xlu0 %v728, 32
    %v731 = vpop.permute.xlu0 %730
    %v733 = vadd.f32 %v723, %v731
    %v734 = vtanh.pop %v733
    %736 = vrot.lane.b32.xlu0 %v734, 32
    %v737 = vpop.permute.xlu0 %736
    %v739 = vmul.f32 %v718, %v737
    %v740 = vpack.c.bf16 %v739, %v739
    %v742 = vrot.slane %v740, 2
    %743 = vrot.lane.b32.xlu0 %v742, 64
    %v744 = vpop.permute.xlu0 %743
    %v746 = vsel %vm141, %v744, 0
    %748 = vmatprep.subr.bf16.mxu0 0
    %749 = vmatpush1.bf16.msra.mxu0 %v199
    %750 = vmatprep.subr.bf16.mxu0 0
    %751 = vmatpush1.bf16.msra.mxu0 %v200
    %752 = vmatprep.subr.bf16.mxu0 0
    %753 = vmatpush1.bf16.msra.mxu0 0
    %754 = vmatprep.subr.bf16.mxu0 0
    %755 = vmatpush1.bf16.msra.mxu0 0
    %756 = vmatprep.subr.bf16.mxu0 0
    %757 = vmatpush1.bf16.msra.mxu0 0
    %758 = vmatprep.subr.bf16.mxu0 0
    %759 = vmatpush1.bf16.msra.mxu0 0
    %760 = vmatprep.subr.bf16.mxu0 0
    %761 = vmatpush1.bf16.msra.mxu0 0
    %762 = vmatprep.subr.bf16.mxu0 0
    %763 = vmatpush1.bf16.msra.mxu0 0
    %764 = vmatprep.subr.bf16.mxu0 0
    %765 = vmatpush1.bf16.msra.mxu0 0
    %766 = vmatprep.subr.bf16.mxu0 0
    %767 = vmatpush1.bf16.msra.mxu0 0
    %768 = vmatprep.subr.bf16.mxu0 0
    %769 = vmatpush1.bf16.msra.mxu0 0
    %770 = vmatprep.subr.bf16.mxu0 0
    %771 = vmatpush1.bf16.msra.mxu0 0
    %772 = vmatprep.subr.bf16.mxu0 0
    %773 = vmatpush1.bf16.msra.mxu0 0
    %774 = vmatprep.subr.bf16.mxu0 0
    %775 = vmatpush1.bf16.msra.mxu0 0
    %776 = vmatprep.subr.bf16.mxu0 0
    %777 = vmatpush1.bf16.msra.mxu0 0
    %778 = vmatprep.subr.bf16.mxu0 0
    %779 = vmatpush1.bf16.msra.mxu0 0
    %780 = vmatprep.mubr.bf16.mxu0 0
    %781 = vmatmul.mubr.bf16.gmra.mrb[0].mxu0 %v746
    %v782 = vpop.f32.mrb[0].mxu0
    %v783 = vadd.f32 0.0, %v782
    %v784 = vpop.f32.mrb[0].mxu0
    %v785 = vpop.f32.mrb[0].mxu0
    %v786 = vpop.f32.mrb[0].mxu0
    %787 = vdwg.mxu0
    %v789 = vrot.slane %v783, 2
    %v791 = vadd.f32 %v183, %v789
    %v792 = vxor.u32 %v791, 2147483648
    %v793 = vmul.f32 %v792, 1.442695
    %v794 = vpow.pop %v793
    %v795 = vadd.f32 %v794, 1.0
    %v796 = vrcp.pop %v795
    %v797 = vmul.f32 1.0, %v796
    %v798 = vtanh.pop %v791
    %v800 = vrot.slane %v733, 6
    %v802 = vmul.f32 %v797, %v800
    %804 = vrot.lane.b32.xlu0 %v798, 32
    %v805 = vpop.permute.xlu0 %804
    %v807 = vmul.f32 %v797, %v805
    %809 = vrot.lane.b32.xlu0 %v807, 32
    %v810 = vpop.permute.xlu0 %809
    %v812 = vadd.f32 %v802, %v810
    %v813 = vtanh.pop %v812
    %815 = vrot.lane.b32.xlu0 %v813, 32
    %v816 = vpop.permute.xlu0 %815
    %v818 = vmul.f32 %v797, %v816
    %v819 = vxor.u32 %v185, 2147483648
    %v820 = vmul.f32 %v819, 1.442695
    %v821 = vpow.pop %v820
    %v822 = vadd.f32 %v821, 1.0
    %v823 = vrcp.pop %v822
    %v824 = vmul.f32 1.0, %v823
    %v825 = vtanh.pop %v185
    %827 = vrot.lane.b32.xlu0 %v825, 32
    %v828 = vpop.permute.xlu0 %827
    %v830 = vmul.f32 %v824, %v828
    %v831 = vtanh.pop %v830
    %833 = vrot.lane.b32.xlu0 %v831, 64
    %v834 = vpop.permute.xlu0 %833
    %v836 = vmul.f32 %v824, %v834
    %v837 = vld [vmem:[#allocation5 + $0x40] sm:$0xf]
    %v838 = vld [vmem:[#allocation5 + $0x48] sm:$0xf]
    %v839 = vld [vmem:[#allocation5 + $0x50] sm:$0xf]
    %v840 = vld [vmem:[#allocation5 + $0x58] sm:$0xf]
    %v841 = vld [vmem:[#allocation5 + $0x60] sm:$0xf]
    %v842 = vld [vmem:[#allocation5 + $0x68] sm:$0xf]
    %v843 = vld [vmem:[#allocation5 + $0x70] sm:$0xf]
    %v844 = vld [vmem:[#allocation5 + $0x78] sm:$0xf]
    %v845 = vpack.c.bf16 %v818, %v818
    %v846 = vpack.c.bf16 %v836, %v836
    %v848 = vrot.slane %v846, 3
    %849 = vrot.lane.b32.xlu0 %v848, 64
    %v850 = vpop.permute.xlu0 %849
    %v855 = vunpack.c.l.b16 %v841
    %v856 = vunpack.c.l.b16 %v842
    %v857 = vunpack.c.l.b16 %v843
    %v858 = vunpack.c.l.b16 %v844
    %v859 = vpack.c.b16 %v856, %v855
    %v860 = vpack.c.b16 %v858, %v857
    %v864 = vsel %vm141, %v850, 0
    %866 = vmatprep.subr.bf16.mxu0 0
    %867 = vmatpush1.bf16.msra.mxu0 %v859
    %868 = vmatprep.subr.bf16.mxu0 0
    %869 = vmatpush1.bf16.msra.mxu0 %v860
    %870 = vmatprep.subr.bf16.mxu0 0
    %871 = vmatpush1.bf16.msra.mxu0 0
    %872 = vmatprep.subr.bf16.mxu0 0
    %873 = vmatpush1.bf16.msra.mxu0 0
    %874 = vmatprep.subr.bf16.mxu0 0
    %875 = vmatpush1.bf16.msra.mxu0 0
    %876 = vmatprep.subr.bf16.mxu0 0
    %877 = vmatpush1.bf16.msra.mxu0 0
    %878 = vmatprep.subr.bf16.mxu0 0
    %879 = vmatpush1.bf16.msra.mxu0 0
    %880 = vmatprep.subr.bf16.mxu0 0
    %881 = vmatpush1.bf16.msra.mxu0 0
    %882 = vmatprep.subr.bf16.mxu0 0
    %883 = vmatpush1.bf16.msra.mxu0 0
    %884 = vmatprep.subr.bf16.mxu0 0
    %885 = vmatpush1.bf16.msra.mxu0 0
    %886 = vmatprep.subr.bf16.mxu0 0
    %887 = vmatpush1.bf16.msra.mxu0 0
    %888 = vmatprep.subr.bf16.mxu0 0
    %889 = vmatpush1.bf16.msra.mxu0 0
    %890 = vmatprep.subr.bf16.mxu0 0
    %891 = vmatpush1.bf16.msra.mxu0 0
    %892 = vmatprep.subr.bf16.mxu0 0
    %893 = vmatpush1.bf16.msra.mxu0 0
    %894 = vmatprep.subr.bf16.mxu0 0
    %895 = vmatpush1.bf16.msra.mxu0 0
    %896 = vmatprep.subr.bf16.mxu0 0
    %897 = vmatpush1.bf16.msra.mxu0 0
    %898 = vmatprep.mubr.bf16.mxu0 0
    %899 = vmatmul.mubr.bf16.gmra.mrb[0].mxu0 %v864
    %v900 = vpop.f32.mrb[0].mxu0
    %v901 = vadd.f32 0.0, %v900
    %v902 = vpop.f32.mrb[0].mxu0
    %v903 = vpop.f32.mrb[0].mxu0
    %v904 = vpop.f32.mrb[0].mxu0
    %905 = vdwg.mxu0
    %v907 = vrot.slane %v845, 3
    %908 = vrot.lane.b32.xlu0 %v907, 64
    %v909 = vpop.permute.xlu0 %908
    %v914 = vunpack.c.l.b16 %v837
    %v915 = vunpack.c.l.b16 %v838
    %v916 = vunpack.c.l.b16 %v839
    %v917 = vunpack.c.l.b16 %v840
    %v918 = vpack.c.b16 %v915, %v914
    %v919 = vpack.c.b16 %v917, %v916
    %v923 = vsel %vm141, %v909, 0
    %925 = vmatprep.subr.bf16.mxu0 0
    %926 = vmatpush1.bf16.msra.mxu0 %v918
    %927 = vmatprep.subr.bf16.mxu0 0
    %928 = vmatpush1.bf16.msra.mxu0 %v919
    %929 = vmatprep.subr.bf16.mxu0 0
    %930 = vmatpush1.bf16.msra.mxu0 0
    %931 = vmatprep.subr.bf16.mxu0 0
    %932 = vmatpush1.bf16.msra.mxu0 0
    %933 = vmatprep.subr.bf16.mxu0 0
    %934 = vmatpush1.bf16.msra.mxu0 0
    %935 = vmatprep.subr.bf16.mxu0 0
    %936 = vmatpush1.bf16.msra.mxu0 0
    %937 = vmatprep.subr.bf16.mxu0 0
    %938 = vmatpush1.bf16.msra.mxu0 0
    %939 = vmatprep.subr.bf16.mxu0 0
    %940 = vmatpush1.bf16.msra.mxu0 0
    %941 = vmatprep.subr.bf16.mxu0 0
    %942 = vmatpush1.bf16.msra.mxu0 0
    %943 = vmatprep.subr.bf16.mxu0 0
    %944 = vmatpush1.bf16.msra.mxu0 0
    %945 = vmatprep.subr.bf16.mxu0 0
    %946 = vmatpush1.bf16.msra.mxu0 0
    %947 = vmatprep.subr.bf16.mxu0 0
    %948 = vmatpush1.bf16.msra.mxu0 0
    %949 = vmatprep.subr.bf16.mxu0 0
    %950 = vmatpush1.bf16.msra.mxu0 0
    %951 = vmatprep.subr.bf16.mxu0 0
    %952 = vmatpush1.bf16.msra.mxu0 0
    %953 = vmatprep.subr.bf16.mxu0 0
    %954 = vmatpush1.bf16.msra.mxu0 0
    %955 = vmatprep.subr.bf16.mxu0 0
    %956 = vmatpush1.bf16.msra.mxu0 0
    %957 = vmatprep.mubr.bf16.mxu0 0
    %958 = vmatmul.mubr.bf16.gmra.mrb[0].mxu0 %v923
    %v959 = vpop.f32.mrb[0].mxu0
    %v960 = vadd.f32 %v901, %v959
    %v961 = vpop.f32.mrb[0].mxu0
    %v962 = vpop.f32.mrb[0].mxu0
    %v963 = vpop.f32.mrb[0].mxu0
    %964 = vdwg.mxu0
    %v965 = vld [vmem:[%s3 + $0x1] sm:$0x1]
    %v966 = vlaneseq
    %v967 = vshrl.u32 %v966, 7
    %v968 = vsub.s32 0, %v967
    %v969 = vrot.slane %v965, %v968
    %v970 = vadd.f32 %v960, %v969
    %vm971 = vcmask 25600
    %972 = vst.msk [vmem:[#allocation8] sm:$0x3] %vm971, %v970
    // Predicated region
    $region18: #{tpu_custom_call.1} parent=1 // pred_check
      _
    $region19: #{tpu_custom_call.1} parent=1 // pred_check_branch
      %974 = sbr.rel (0) target = $region21
    $region20: #{tpu_custom_call.1} parent=1 // pred_region
      %s976 = ssub.s32 32, 32
      %977 = vsyncadd [#allocation7], %s976
      %s979 = sshll.u32 [#allocation8], 4
      %s980 = int_to_ptr.vmem [resolvable:$true] %s979
      %982 = dma.vmem_to_hbm [thread:$0]  %s980, 32, %s4, [#allocation7]
    $region21: #{tpu_custom_call.1} parent=1 // pred_fallthru
      _
    // Predicated region
    $region22: #{tpu_custom_call.1} parent=1 // pred_check
      _
    $region23: #{tpu_custom_call.1} parent=1 // pred_check_branch
      %984 = sbr.rel (0) target = $region25
    $region24: #{tpu_custom_call.1} parent=1 // pred_region
      %985 = dma.done [#allocation7], 32
    $region25: #{tpu_custom_call.1} parent=1 // pred_fallthru
      _
    %986 = vsyncpa [#allocation6], 1
    %987 = vsyncpa [#allocation7], 1

</llo_original>
